<compile_context>
chip_gen: v7x
topology: tpu7x:2x2x1
jax: 0.10.0
libtpu: 0.0.40
codegen_flags: <defaults>
</compile_context>

<pallas_src>
import math
import functools
import numpy as np
import jax
import jax.numpy as jnp
from jax.experimental import pallas as pl
from jax.experimental.pallas import tpu as pltpu

INF = 100000.0
SQRT_THIRD = math.sqrt(1.0 / 3.0)

# ---------------- configuration (small, consistent with GABlock.__init__) ----------------
NODE_DIM = 32      # node_feat_dim (F)
PAIR_DIM = 16      # pair_feat_dim (C)
VALUE_DIM = 16     # value_dim
QK_DIM = 16        # query_key_dim
NUM_QPTS = 4       # num_query_points
NUM_VPTS = 4       # num_value_points
NUM_HEADS = 4      # num_heads
N, L = 2, 8        # batch, sequence length

# shared stacked-feature width: [q|qp] / [k|kp] and [v|vp] must line up for the fused matmuls
assert QK_DIM + 3 * NUM_QPTS == VALUE_DIM + 3 * NUM_VPTS

_BF16_EXP = None
def _bf16_exp_ok():
    """bf16 exp on the EUP for v6e/v7x; keep f32 on v5e and older (no bf16 EUP path)."""
    global _BF16_EXP
    if _BF16_EXP is None:
        try:
            kind = jax.devices()[0].device_kind.lower()
        except Exception:
            kind = ""
        _BF16_EXP = not any(v in kind for v in ("v2", "v3", "v4", "v5"))
    return _BF16_EXP


# ============================ Kernel A: geometric attention ==============================
def ga_attn_kernel(q_ref, kv_ref, z_ref, bias_ref, p2n_ref, agg_ref, alpha_sc, *, bf16_exp):
    """One (batch element, query-row tile) step.
      q_ref   : (H, TQ, D)    bf16   [q*s1 | qp*s2_h],  D = QK + 3*Pq
      kv_ref  : (2, H, L, D)  bf16   [0] = [k | kp*s2_h], [1] = [v | vp (global frame)]
      z_ref   : (TQ, L, C)    bf16   pair features (query-row slice)
      bias_ref: (H, TQ, L)    bf16   sqrt(1/3)*pair_logits - sqrt(1/3)*gamma*|kp|^2 + mask
      p2n_ref : (TQ, H, C)    f32    pair aggregation
      agg_ref : (H, TQ, D)    f32    [node aggregation | value-point aggregation (global)]
      alpha_sc: (TQ, H, L)    bf16   scratch: query-row-major relayout of alpha
    """
    f32, bf16 = jnp.float32, jnp.bfloat16
    H = q_ref.shape[0]

    qcat = q_ref[...]
    kcat = kv_ref[0]
    vvp = kv_ref[1]

    # fused node + spatial-cross logits: ONE MXU contraction (scales folded in the wrapper).
    # Remaining spatial terms: -coef*|kp|^2 lives in bias; -coef*|qp|^2 is dropped (exact,
    # softmax shift invariance).
    s = jnp.einsum('hid,hjd->hij', qcat, kcat, preferred_element_type=f32)
    logits = s + bias_ref[...].astype(f32)                       # (H, TQ, L)

    # masked softmax over the lane (L_j) axis
    m = jnp.max(logits, axis=-1, keepdims=True)
    if bf16_exp:
        e = jnp.exp((logits - m).astype(bf16))                   # bf16 EUP path (v6e/v7x)
        ssum = jnp.sum(e.astype(f32), axis=-1, keepdims=True)
        ab = e * pl.reciprocal(ssum, approx=True).astype(bf16)   # (H, TQ, L) bf16
    else:
        e = jnp.exp(logits - m)                                  # f32 path (v5e and older)
        ssum = jnp.sum(e, axis=-1, keepdims=True)
        ab = (e * pl.reciprocal(ssum, approx=True)).astype(bf16)
    # NOTE: the reference also zeroes alpha rows of masked queries; skipped (exact) because
    # kernel B's mask_zero annihilates those rows of feat_all before the residual.

    # fused node + value-point aggregation: ONE MXU pass over alpha, single dense store
    agg_ref[...] = jnp.einsum('hij,hjd->hid', ab, vvp, preferred_element_type=f32)

    # pair aggregation is batched per query row -> (H,TQ,L)->(TQ,H,L) relayout through a bf16
    # scratch (H = 4 statically-unrolled row stores; no f32 round trip / convert).
    for h in range(H):
        alpha_sc[:, h, :] = ab[h]
    p2n_ref[...] = jnp.einsum('ihj,ijc->ihc', alpha_sc[...], z_ref[...],
                              preferred_element_type=f32)


def attn_pallas(qcat, kv, z_b, bias):
    Nb, H, Ls, D = qcat.shape
    C = z_b.shape[-1]
    TQ = Ls if Ls <= 256 else 256          # query-row tile (full slab at toy size)
    assert Ls % TQ == 0
    grid = (Nb, Ls // TQ)

    grid_spec = pltpu.PrefetchScalarGridSpec(
        num_scalar_prefetch=0,
        grid=grid,
        in_specs=[
            pl.BlockSpec((None, H, TQ, D), lambda n, qi: (n, 0, qi, 0)),
            pl.BlockSpec((None, 2, H, Ls, D), lambda n, qi: (n, 0, 0, 0, 0)),
            pl.BlockSpec((None, TQ, Ls, C), lambda n, qi: (n, qi, 0, 0)),
            pl.BlockSpec((None, H, TQ, Ls), lambda n, qi: (n, 0, qi, 0)),
        ],
        out_specs=[
            pl.BlockSpec((None, TQ, H, C), lambda n, qi: (n, qi, 0, 0)),
            pl.BlockSpec((None, H, TQ, D), lambda n, qi: (n, 0, qi, 0)),
        ],
        scratch_shapes=[pltpu.VMEM((TQ, H, Ls), jnp.bfloat16)],
    )
    kernel = functools.partial(ga_attn_kernel, bf16_exp=_bf16_exp_ok())
    return pl.pallas_call(
        kernel,
        out_shape=(jax.ShapeDtypeStruct((Nb, Ls, H, C), jnp.float32),
                   jax.ShapeDtypeStruct((Nb, H, Ls, D), jnp.float32)),
        grid_spec=grid_spec,
        compiler_params=pltpu.CompilerParams(
            dimension_semantics=("parallel", "parallel"),
            vmem_limit_bytes=48 * 1024 * 1024),
    )(qcat, kv, z_b, bias)


# =========== Kernel B: out_transform + mask + LN1 + MLP transition + LN2 (fused) ===========
def ga_out_kernel(feat_ref, x_ref, mask_ref, wout_ref, wmlp_ref, vecs_ref, out_ref):
    """feat (TM,Din) bf16 | x (TM,F) f32 | mask (TM,1) f32 | wout (Din,F) bf16 |
       wmlp (3,F,F) bf16 | vecs (8,F) f32 rows=[bout,ln1_g,ln1_b,b1,b2,b3,ln2_g,ln2_b]"""
    f32 = jnp.float32
    bf16 = jnp.bfloat16

    f = jnp.dot(feat_ref[...], wout_ref[...], preferred_element_type=f32) + vecs_ref[0:1, :]
    f = f * mask_ref[...]                                   # mask_zero
    h = x_ref[...] + f                                      # residual 1
    mu = jnp.mean(h, axis=-1, keepdims=True)
    var = jnp.mean((h - mu) ** 2, axis=-1, keepdims=True)
    h = (h - mu) * jax.lax.rsqrt(var + 1e-5) * vecs_ref[1:2, :] + vecs_ref[2:3, :]   # LN1

    m1 = jnp.maximum(jnp.dot(h.astype(bf16), wmlp_ref[0], preferred_element_type=f32)
                     + vecs_ref[3:4, :], 0.0)
    m2 = jnp.maximum(jnp.dot(m1.astype(bf16), wmlp_ref[1], preferred_element_type=f32)
                     + vecs_ref[4:5, :], 0.0)
    m3 = jnp.dot(m2.astype(bf16), wmlp_ref[2], preferred_element_type=f32) + vecs_ref[5:6, :]

    h2 = h + m3                                             # residual 2
    mu2 = jnp.mean(h2, axis=-1, keepdims=True)
    var2 = jnp.mean((h2 - mu2) ** 2, axis=-1, keepdims=True)
    out_ref[...] = (h2 - mu2) * jax.lax.rsqrt(var2 + 1e-5) * vecs_ref[6:7, :] + vecs_ref[7:8, :]


def out_pallas(feat_cat, x_flat, mask_flat, wout, wmlp, vecs):
    M, Din = feat_cat.shape
    F = x_flat.shape[-1]
    TM = M                                   # full-slab fallback (block == full array dims)
    for cand in (512, 256, 128, 64, 32, 16): # big row tiles amortize per-step grid overhead
        if M % cand == 0:
            TM = cand
            break

    row2 = lambda i: (i, 0)
    c2 = lambda i: (0, 0)
    c3 = lambda i: (0, 0, 0)
    grid_spec = pltpu.PrefetchScalarGridSpec(
        num_scalar_prefetch=0,
        grid=(M // TM,),
        in_specs=[pl.BlockSpec((TM, Din), row2),
                  pl.BlockSpec((TM, F), row2),
                  pl.BlockSpec((TM, 1), row2),
                  pl.BlockSpec(wout.shape, c2),      # resident weights
                  pl.BlockSpec(wmlp.shape, c3),
                  pl.BlockSpec(vecs.shape, c2)],
        out_specs=pl.BlockSpec((TM, F), row2),
    )
    return pl.pallas_call(
        ga_out_kernel,
        out_shape=jax.ShapeDtypeStruct((M, F), jnp.float32),
        grid_spec=grid_spec,
        compiler_params=pltpu.CompilerParams(
            dimension_semantics=("parallel",),
            vmem_limit_bytes=32 * 1024 * 1024),
    )(feat_cat, x_flat, mask_flat, wout, wmlp, vecs)


# ================================== glue / forward =======================================
def init_params(key):
    ks = jax.random.split(key, 12)
    F, C, H = NODE_DIM, PAIR_DIM, NUM_HEADS

    def lin(k, din, dout):
        return (jax.random.normal(k, (din, dout), jnp.float32) / math.sqrt(din)).astype(jnp.float32)

    p = {}
    p['Wq'] = lin(ks[0], F, QK_DIM * H)
    p['Wk'] = lin(ks[1], F, QK_DIM * H)
    p['Wv'] = lin(ks[2], F, VALUE_DIM * H)
    p['Wpb'] = lin(ks[3], C, H)
    p['spatial_coef'] = jnp.full((H,), math.log(math.exp(1.0) - 1.0), jnp.float32)
    p['Wqp'] = lin(ks[4], F, NUM_QPTS * H * 3)
    p['Wkp'] = lin(ks[5], F, NUM_QPTS * H * 3)
    p['Wvp'] = lin(ks[6], F, NUM_VPTS * H * 3)
    d_in = H * C + H * VALUE_DIM + H * NUM_VPTS * (3 + 3 + 1)
    p['Wout'] = lin(ks[7], d_in, F)
    p['bout'] = jnp.zeros((F,), jnp.float32)
    p['ln1_g'] = jnp.ones((F,), jnp.float32)
    p['ln1_b'] = jnp.zeros((F,), jnp.float32)
    p['W1'] = lin(ks[8], F, F); p['b1'] = jnp.zeros((F,), jnp.float32)
    p['W2'] = lin(ks[9], F, F); p['b2'] = jnp.zeros((F,), jnp.float32)
    p['W3'] = lin(ks[10], F, F); p['b3'] = jnp.zeros((F,), jnp.float32)
    p['ln2_g'] = jnp.ones((F,), jnp.float32)
    p['ln2_b'] = jnp.zeros((F,), jnp.float32)
    return p


def ga_block_forward(params, R, t, x, z, mask, mask_pair):
    Nb, Ls, F = x.shape
    H, QK, V, Pq, Pv = NUM_HEADS, QK_DIM, VALUE_DIM, NUM_QPTS, NUM_VPTS
    C = z.shape[-1]
    bf16, f32 = jnp.bfloat16, jnp.float32

    # ---- linear projections (glue), head-major (N, H, L, d) ----
    def head_major(y, d):
        return y.reshape(Nb, Ls, H, d).transpose(0, 2, 1, 3)

    q_l = head_major(x @ params['Wq'], QK)
    k_l = head_major(x @ params['Wk'], QK)
    v_l = head_major(x @ params['Wv'], V)

    # ---- local -> global point transforms (glue: 3x3 frame rotations) ----
    def l2g(pts):  # (N, L, P, 3) local -> global
        return jnp.einsum('nlab,nlpb->nlpa', R, pts) + t[:, :, None, :]

    def head_pts(w, P):
        g = l2g((x @ w).reshape(Nb, Ls, H * P, 3))
        return g.reshape(Nb, Ls, H, P * 3).transpose(0, 2, 1, 3)     # (N, H, L, P*3)

    qp = head_pts(params['Wqp'], Pq)
    kp = head_pts(params['Wkp'], Pq)
    vp = head_pts(params['Wvp'], Pv)

    # per-head spatial coefficient folded into prescales of the stacked q/k features so the
    # whole node + spatial-cross logit is ONE contraction; the |kp|^2 term moves to the bias
    # and the |qp|^2 term is dropped (softmax shift invariance, exact).
    gamma = jax.nn.softplus(params['spatial_coef']) * math.sqrt(2.0 / (9.0 * Pq)) / 2.0  # (H,)
    pscale = jnp.sqrt(2.0 * SQRT_THIRD * gamma)[None, :, None, None]
    kp_s = kp * pscale
    qcat = jnp.concatenate([q_l * (SQRT_THIRD / math.sqrt(QK)), qp * pscale], axis=-1)
    kcat = jnp.concatenate([k_l, kp_s], axis=-1)
    vvp = jnp.concatenate([v_l, vp], axis=-1)
    kv = jnp.stack([kcat, vvp], axis=1).astype(bf16)                 # (N, 2, H, L, 28)

    # ---- bias: sqrt(1/3)*pair logits - sqrt(1/3)*gamma*|kp|^2 + additive mask (one bf16) ----
    mask_f = mask.astype(f32)
    allowed = (mask_f[:, :, None] * mask_f[:, None, :]) * mask_pair.astype(f32)[None]
    lp = jnp.einsum('nijc,ch->nhij', z, params['Wpb']) * SQRT_THIRD
    kn = -0.5 * jnp.sum(kp_s * kp_s, axis=-1)                        # (N, H, L)
    bias = lp + kn[:, :, None, :] + (allowed[:, None, :, :] - 1.0) * INF
    # TODO(synk): computing lp in-kernel from z would remove this (N,H,L,L) HBM round trip,
    # but needs a rank-3-rhs dot_general / lane-splitting reshape that Mosaic may not lower.

    p2n, agg = attn_pallas(qcat.astype(bf16), kv, z.astype(bf16), bias.astype(bf16))
    # p2n: (N, L, H, C) ; agg: (N, H, L, V + 3*Pv)

    feat_p2n = p2n.reshape(Nb, Ls, H * C)
    agg = agg.transpose(0, 2, 1, 3)                                  # (N, L, H, 28)
    feat_node = agg[..., :V].reshape(Nb, Ls, H * V)
    ap = agg[..., V:].reshape(Nb, Ls, H, Pv, 3)                      # aggregated global points

    # ---- global -> local on aggregated points (glue), distance / direction features ----
    feat_points = jnp.einsum('nlba,nlhpb->nlhpa', R, ap - t[:, :, None, None, :])
    feat_dist = jnp.linalg.norm(feat_points, axis=-1)
    feat_dir = feat_points / (feat_dist[..., None] + 1e-4)
    feat_spatial = jnp.concatenate([feat_points.reshape(Nb, Ls, -1),
                                    feat_dist.reshape(Nb, Ls, -1),
                                    feat_dir.reshape(Nb, Ls, -1)], axis=-1)

    feat_cat = jnp.concatenate([feat_p2n, feat_node, feat_spatial], axis=-1)   # (N, L, 240)

    # ---- fused output transform / LayerNorms / MLP (kernel B) ----
    vecs = jnp.stack([params['bout'], params['ln1_g'], params['ln1_b'],
                      params['b1'], params['b2'], params['b3'],
                      params['ln2_g'], params['ln2_b']], axis=0)               # (8, F)
    wmlp = jnp.stack([params['W1'], params['W2'], params['W3']], axis=0).astype(bf16)
    out = out_pallas(feat_cat.reshape(Nb * Ls, -1).astype(bf16),
                     x.reshape(Nb * Ls, F),
                     mask_f.reshape(Nb * Ls, 1),
                     params['Wout'].astype(bf16),
                     wmlp,
                     vecs)
    return out.reshape(Nb, Ls, F)


if __name__ == "__main__":
    key = jax.random.PRNGKey(0)
    kp_, kR, kt, kx, kz = jax.random.split(key, 5)

    params = init_params(kp_)

    # random rigid frames: R from QR of random matrices (numpy, pure glue)
    A = np.asarray(jax.random.normal(kR, (N, L, 3, 3), jnp.float32), dtype=np.float64)
    Rm = np.linalg.qr(A)[0]
    R = jnp.asarray(Rm, jnp.float32)                       # (N, L, 3, 3)
    t = jax.random.normal(kt, (N, L, 3), jnp.float32)      # (N, L, 3)
    x = jax.random.normal(kx, (N, L, NODE_DIM), jnp.float32)        # (N, L, F)
    z = jax.random.normal(kz, (N, L, L, PAIR_DIM), jnp.float32)     # (N, L, L, C)

    idx = jnp.arange(L)
    mask = jnp.stack([idx < L, idx < L - 2])               # (N, L) bool
    mask_pair = jnp.abs(idx[:, None] - idx[None, :]) <= 5  # (L, L) bool

    fwd = jax.jit(ga_block_forward)
    out = fwd(params, R, t, x, z, mask, mask_pair)
    out = jax.block_until_ready(out)
    assert out.shape == (N, L, NODE_DIM)
    assert bool(jnp.all(jnp.isfinite(out)))
    print("KERNEL_OK")
</pallas_src>

<mosaic_0001>
module attributes {stable_mosaic.version = 11 : i64} {
  func.func @ga_attn_kernel(%arg0: i32, %arg1: i32, %arg2: memref<1x4x8x28xbf16, #tpu.memory_space<vmem>>, %arg3: memref<1x2x4x8x28xbf16, #tpu.memory_space<vmem>>, %arg4: memref<1x8x8x16xbf16, #tpu.memory_space<vmem>>, %arg5: memref<1x4x8x8xbf16, #tpu.memory_space<vmem>>, %arg6: memref<1x8x4x16xf32, #tpu.memory_space<vmem>>, %arg7: memref<1x4x8x28xf32, #tpu.memory_space<vmem>>, %arg8: memref<8x4x8xbf16, #tpu.memory_space<vmem>>) attributes {dimension_semantics = [#tpu.dimension_semantics<parallel>, #tpu.dimension_semantics<parallel>], iteration_bounds = array<i64: 2, 1>, scalar_prefetch = 0 : i64, scratch_operands = 1 : i64, tpu.core_type = #tpu.core_type<tc>, window_params = [{transform_indices = @transform_0, window_bounds = array<i64: 1, 4, 8, 28>}, {transform_indices = @transform_1, window_bounds = array<i64: 1, 2, 4, 8, 28>}, {transform_indices = @transform_2, window_bounds = array<i64: 1, 8, 8, 16>}, {transform_indices = @transform_3, window_bounds = array<i64: 1, 4, 8, 8>}, {transform_indices = @transform_4, window_bounds = array<i64: 1, 8, 4, 16>}, {transform_indices = @transform_5, window_bounds = array<i64: 1, 4, 8, 28>}]} {
    %c0 = arith.constant 0 : index
    %c0_0 = arith.constant 0 : index
    %c0_1 = arith.constant 0 : index
    %c0_2 = arith.constant 0 : index
    %0 = vector.load %arg2[%c0, %c0_0, %c0_1, %c0_2] : memref<1x4x8x28xbf16, #tpu.memory_space<vmem>>, vector<1x4x8x28xbf16>
    %1 = vector.shape_cast %0 : vector<1x4x8x28xbf16> to vector<4x8x28xbf16>
    %c0_3 = arith.constant 0 : index
    %c0_4 = arith.constant 0 : index
    %c0_5 = arith.constant 0 : index
    %c0_6 = arith.constant 0 : index
    %c0_7 = arith.constant 0 : index
    %2 = vector.load %arg3[%c0_3, %c0_4, %c0_5, %c0_6, %c0_7] : memref<1x2x4x8x28xbf16, #tpu.memory_space<vmem>>, vector<1x1x4x8x28xbf16>
    %3 = vector.shape_cast %2 : vector<1x1x4x8x28xbf16> to vector<4x8x28xbf16>
    %c0_8 = arith.constant 0 : index
    %c1 = arith.constant 1 : index
    %c0_9 = arith.constant 0 : index
    %c0_10 = arith.constant 0 : index
    %c0_11 = arith.constant 0 : index
    %4 = vector.load %arg3[%c0_8, %c1, %c0_9, %c0_10, %c0_11] : memref<1x2x4x8x28xbf16, #tpu.memory_space<vmem>>, vector<1x1x4x8x28xbf16>
    %5 = vector.shape_cast %4 : vector<1x1x4x8x28xbf16> to vector<4x8x28xbf16>
    "tpu.trace_start"() <{level = 10 : i32, message = "hid,hjd->hij"}> : () -> ()
    %cst = arith.constant dense<0.000000e+00> : vector<4x8x8xf32>
    %6 = tpu.matmul %1, %3, %cst {dimension_numbers = #tpu.dot_dimension_numbers<[2], [2], [1], [1], [0, 0, 0, 1, 1, 1], [0], [0]>} : vector<4x8x28xbf16>, vector<4x8x28xbf16>, vector<4x8x8xf32> -> vector<4x8x8xf32>
    "tpu.trace_stop"() : () -> ()
    %c0_12 = arith.constant 0 : index
    %c0_13 = arith.constant 0 : index
    %c0_14 = arith.constant 0 : index
    %c0_15 = arith.constant 0 : index
    %7 = vector.load %arg5[%c0_12, %c0_13, %c0_14, %c0_15] : memref<1x4x8x8xbf16, #tpu.memory_space<vmem>>, vector<1x4x8x8xbf16>
    %8 = vector.shape_cast %7 : vector<1x4x8x8xbf16> to vector<4x8x8xbf16>
    %9 = arith.extf %8 : vector<4x8x8xbf16> to vector<4x8x8xf32>
    %10 = arith.addf %6, %9 : vector<4x8x8xf32>
    %cst_16 = arith.constant dense<0xFF800000> : vector<4x8xf32>
    %11 = vector.multi_reduction <maximumf>, %10, %cst_16 [2] : vector<4x8x8xf32> to vector<4x8xf32>
    %12 = vector.shape_cast %11 : vector<4x8xf32> to vector<4x8x1xf32>
    %13 = vector.broadcast %12 : vector<4x8x1xf32> to vector<4x8x8xf32>
    %14 = arith.subf %10, %13 : vector<4x8x8xf32>
    %15 = arith.truncf %14 : vector<4x8x8xf32> to vector<4x8x8xbf16>
    %16 = math.exp %15 : vector<4x8x8xbf16>
    %17 = arith.extf %16 : vector<4x8x8xbf16> to vector<4x8x8xf32>
    %cst_17 = arith.constant dense<0.000000e+00> : vector<4x8xf32>
    %18 = vector.multi_reduction <add>, %17, %cst_17 [2] : vector<4x8x8xf32> to vector<4x8xf32>
    %19 = vector.shape_cast %18 : vector<4x8xf32> to vector<4x8x1xf32>
    %20 = tpu.reciprocal %19 {approx = true} : vector<4x8x1xf32> -> vector<4x8x1xf32>
    %21 = arith.truncf %20 : vector<4x8x1xf32> to vector<4x8x1xbf16>
    %22 = vector.broadcast %21 : vector<4x8x1xbf16> to vector<4x8x8xbf16>
    %23 = arith.mulf %16, %22 : vector<4x8x8xbf16>
    "tpu.trace_start"() <{level = 10 : i32, message = "hij,hjd->hid"}> : () -> ()
    %cst_18 = arith.constant dense<0.000000e+00> : vector<4x8x28xf32>
    %24 = tpu.matmul %23, %5, %cst_18 {dimension_numbers = #tpu.dot_dimension_numbers<[2], [1], [1], [2], [0, 0, 0, 1, 1, 2], [0], [0]>} : vector<4x8x8xbf16>, vector<4x8x28xbf16>, vector<4x8x28xf32> -> vector<4x8x28xf32>
    "tpu.trace_stop"() : () -> ()
    %c0_19 = arith.constant 0 : index
    %c0_20 = arith.constant 0 : index
    %c0_21 = arith.constant 0 : index
    %c0_22 = arith.constant 0 : index
    %25 = vector.load %arg7[%c0_19, %c0_20, %c0_21, %c0_22] : memref<1x4x8x28xf32, #tpu.memory_space<vmem>>, vector<1x4x8x28xf32>
    %26 = vector.shape_cast %25 : vector<1x4x8x28xf32> to vector<4x8x28xf32>
    %27 = vector.shape_cast %24 : vector<4x8x28xf32> to vector<1x4x8x28xf32>
    tpu.vector_store %arg7[%c0_19, %c0_20, %c0_21, %c0_22], %27 {strides = array<i32>} : memref<1x4x8x28xf32, #tpu.memory_space<vmem>>, vector<1x4x8x28xf32>,
    %28 = vector.extract_strided_slice %23 {offsets = [0, 0, 0], sizes = [1, 8, 8], strides = [1, 1, 1]} : vector<4x8x8xbf16> to vector<1x8x8xbf16>
    %29 = vector.shape_cast %28 : vector<1x8x8xbf16> to vector<8x8xbf16>
    %c0_23 = arith.constant 0 : index
    %c0_24 = arith.constant 0 : index
    %c0_25 = arith.constant 0 : index
    %30 = vector.load %arg8[%c0_23, %c0_24, %c0_25] : memref<8x4x8xbf16, #tpu.memory_space<vmem>>, vector<8x1x8xbf16>
    %31 = vector.shape_cast %30 : vector<8x1x8xbf16> to vector<8x8xbf16>
    %32 = vector.shape_cast %29 : vector<8x8xbf16> to vector<8x1x8xbf16>
    tpu.vector_store %arg8[%c0_23, %c0_24, %c0_25], %32 {strides = array<i32>} : memref<8x4x8xbf16, #tpu.memory_space<vmem>>, vector<8x1x8xbf16>,
    %33 = vector.extract_strided_slice %23 {offsets = [1, 0, 0], sizes = [1, 8, 8], strides = [1, 1, 1]} : vector<4x8x8xbf16> to vector<1x8x8xbf16>
    %34 = vector.shape_cast %33 : vector<1x8x8xbf16> to vector<8x8xbf16>
    %c0_26 = arith.constant 0 : index
    %c1_27 = arith.constant 1 : index
    %c0_28 = arith.constant 0 : index
    %35 = vector.load %arg8[%c0_26, %c1_27, %c0_28] : memref<8x4x8xbf16, #tpu.memory_space<vmem>>, vector<8x1x8xbf16>
    %36 = vector.shape_cast %35 : vector<8x1x8xbf16> to vector<8x8xbf16>
    %37 = vector.shape_cast %34 : vector<8x8xbf16> to vector<8x1x8xbf16>
    tpu.vector_store %arg8[%c0_26, %c1_27, %c0_28], %37 {strides = array<i32>} : memref<8x4x8xbf16, #tpu.memory_space<vmem>>, vector<8x1x8xbf16>,
    %38 = vector.extract_strided_slice %23 {offsets = [2, 0, 0], sizes = [1, 8, 8], strides = [1, 1, 1]} : vector<4x8x8xbf16> to vector<1x8x8xbf16>
    %39 = vector.shape_cast %38 : vector<1x8x8xbf16> to vector<8x8xbf16>
    %c0_29 = arith.constant 0 : index
    %c2 = arith.constant 2 : index
    %c0_30 = arith.constant 0 : index
    %40 = vector.load %arg8[%c0_29, %c2, %c0_30] : memref<8x4x8xbf16, #tpu.memory_space<vmem>>, vector<8x1x8xbf16>
    %41 = vector.shape_cast %40 : vector<8x1x8xbf16> to vector<8x8xbf16>
    %42 = vector.shape_cast %39 : vector<8x8xbf16> to vector<8x1x8xbf16>
    tpu.vector_store %arg8[%c0_29, %c2, %c0_30], %42 {strides = array<i32>} : memref<8x4x8xbf16, #tpu.memory_space<vmem>>, vector<8x1x8xbf16>,
    %43 = vector.extract_strided_slice %23 {offsets = [3, 0, 0], sizes = [1, 8, 8], strides = [1, 1, 1]} : vector<4x8x8xbf16> to vector<1x8x8xbf16>
    %44 = vector.shape_cast %43 : vector<1x8x8xbf16> to vector<8x8xbf16>
    %c0_31 = arith.constant 0 : index
    %c3 = arith.constant 3 : index
    %c0_32 = arith.constant 0 : index
    %45 = vector.load %arg8[%c0_31, %c3, %c0_32] : memref<8x4x8xbf16, #tpu.memory_space<vmem>>, vector<8x1x8xbf16>
    %46 = vector.shape_cast %45 : vector<8x1x8xbf16> to vector<8x8xbf16>
    %47 = vector.shape_cast %44 : vector<8x8xbf16> to vector<8x1x8xbf16>
    tpu.vector_store %arg8[%c0_31, %c3, %c0_32], %47 {strides = array<i32>} : memref<8x4x8xbf16, #tpu.memory_space<vmem>>, vector<8x1x8xbf16>,
    %c0_33 = arith.constant 0 : index
    %c0_34 = arith.constant 0 : index
    %c0_35 = arith.constant 0 : index
    %48 = vector.load %arg8[%c0_33, %c0_34, %c0_35] : memref<8x4x8xbf16, #tpu.memory_space<vmem>>, vector<8x4x8xbf16>
    %c0_36 = arith.constant 0 : index
    %c0_37 = arith.constant 0 : index
    %c0_38 = arith.constant 0 : index
    %c0_39 = arith.constant 0 : index
    %49 = vector.load %arg4[%c0_36, %c0_37, %c0_38, %c0_39] : memref<1x8x8x16xbf16, #tpu.memory_space<vmem>>, vector<1x8x8x16xbf16>
    %50 = vector.shape_cast %49 : vector<1x8x8x16xbf16> to vector<8x8x16xbf16>
    "tpu.trace_start"() <{level = 10 : i32, message = "ihj,ijc->ihc"}> : () -> ()
    %cst_40 = arith.constant dense<0.000000e+00> : vector<8x4x16xf32>
    %51 = tpu.matmul %48, %50, %cst_40 {dimension_numbers = #tpu.dot_dimension_numbers<[2], [1], [1], [2], [0, 0, 0, 1, 1, 2], [0], [0]>} : vector<8x4x8xbf16>, vector<8x8x16xbf16>, vector<8x4x16xf32> -> vector<8x4x16xf32>
    "tpu.trace_stop"() : () -> ()
    %c0_41 = arith.constant 0 : index
    %c0_42 = arith.constant 0 : index
    %c0_43 = arith.constant 0 : index
    %c0_44 = arith.constant 0 : index
    %52 = vector.load %arg6[%c0_41, %c0_42, %c0_43, %c0_44] : memref<1x8x4x16xf32, #tpu.memory_space<vmem>>, vector<1x8x4x16xf32>
    %53 = vector.shape_cast %52 : vector<1x8x4x16xf32> to vector<8x4x16xf32>
    %54 = vector.shape_cast %51 : vector<8x4x16xf32> to vector<1x8x4x16xf32>
    tpu.vector_store %arg6[%c0_41, %c0_42, %c0_43, %c0_44], %54 {strides = array<i32>} : memref<1x8x4x16xf32, #tpu.memory_space<vmem>>, vector<1x8x4x16xf32>,
    return
  }
  func.func @transform_0(%arg0: i32, %arg1: i32) -> (i32, i32, i32, i32) {
    %c0_i32 = arith.constant 0 : i32
    %c0_i32_0 = arith.constant 0 : i32
    %c0_i32_1 = arith.constant 0 : i32
    return %arg0, %c0_i32, %arg1, %c0_i32_0 : i32, i32, i32, i32
  }
  func.func @transform_1(%arg0: i32, %arg1: i32) -> (i32, i32, i32, i32, i32) {
    %c0_i32 = arith.constant 0 : i32
    %c0_i32_0 = arith.constant 0 : i32
    %c0_i32_1 = arith.constant 0 : i32
    %c0_i32_2 = arith.constant 0 : i32
    %c0_i32_3 = arith.constant 0 : i32
    return %arg0, %c0_i32, %c0_i32_0, %c0_i32_1, %c0_i32_2 : i32, i32, i32, i32, i32
  }
  func.func @transform_2(%arg0: i32, %arg1: i32) -> (i32, i32, i32, i32) {
    %c0_i32 = arith.constant 0 : i32
    %c0_i32_0 = arith.constant 0 : i32
    %c0_i32_1 = arith.constant 0 : i32
    return %arg0, %arg1, %c0_i32, %c0_i32_0 : i32, i32, i32, i32
  }
  func.func @transform_3(%arg0: i32, %arg1: i32) -> (i32, i32, i32, i32) {
    %c0_i32 = arith.constant 0 : i32
    %c0_i32_0 = arith.constant 0 : i32
    %c0_i32_1 = arith.constant 0 : i32
    return %arg0, %c0_i32, %arg1, %c0_i32_0 : i32, i32, i32, i32
  }
  func.func @transform_4(%arg0: i32, %arg1: i32) -> (i32, i32, i32, i32) {
    %c0_i32 = arith.constant 0 : i32
    %c0_i32_0 = arith.constant 0 : i32
    %c0_i32_1 = arith.constant 0 : i32
    return %arg0, %arg1, %c0_i32, %c0_i32_0 : i32, i32, i32, i32
  }
  func.func @transform_5(%arg0: i32, %arg1: i32) -> (i32, i32, i32, i32) {
    %c0_i32 = arith.constant 0 : i32
    %c0_i32_0 = arith.constant 0 : i32
    %c0_i32_1 = arith.constant 0 : i32
    return %arg0, %c0_i32, %arg1, %c0_i32_0 : i32, i32, i32, i32
  }
}

module attributes {stable_mosaic.version = 11 : i64} {
  func.func @ga_out_kernel(%arg0: i32, %arg1: memref<16x240xbf16, #tpu.memory_space<vmem>>, %arg2: memref<16x32xf32, #tpu.memory_space<vmem>>, %arg3: memref<16x1xf32, #tpu.memory_space<vmem>>, %arg4: memref<240x32xbf16, #tpu.memory_space<vmem>>, %arg5: memref<3x32x32xbf16, #tpu.memory_space<vmem>>, %arg6: memref<8x32xf32, #tpu.memory_space<vmem>>, %arg7: memref<16x32xf32, #tpu.memory_space<vmem>>) attributes {dimension_semantics = [#tpu.dimension_semantics<parallel>], iteration_bounds = array<i64: 1>, scalar_prefetch = 0 : i64, scratch_operands = 0 : i64, tpu.core_type = #tpu.core_type<tc>, window_params = [{transform_indices = @transform_0, window_bounds = array<i64: 16, 240>}, {transform_indices = @transform_1, window_bounds = array<i64: 16, 32>}, {transform_indices = @transform_2, window_bounds = array<i64: 16, 1>}, {pipeline_mode = #tpu.pipeline_mode<synchronous>, transform_indices = @transform_3, window_bounds = array<i64: 240, 32>}, {pipeline_mode = #tpu.pipeline_mode<synchronous>, transform_indices = @transform_4, window_bounds = array<i64: 3, 32, 32>}, {pipeline_mode = #tpu.pipeline_mode<synchronous>, transform_indices = @transform_5, window_bounds = array<i64: 8, 32>}, {transform_indices = @transform_6, window_bounds = array<i64: 16, 32>}]} {
    %c0 = arith.constant 0 : index
    %c0_0 = arith.constant 0 : index
    %0 = vector.load %arg1[%c0, %c0_0] : memref<16x240xbf16, #tpu.memory_space<vmem>>, vector<16x240xbf16>
    %c0_1 = arith.constant 0 : index
    %c0_2 = arith.constant 0 : index
    %1 = vector.load %arg4[%c0_1, %c0_2] : memref<240x32xbf16, #tpu.memory_space<vmem>>, vector<240x32xbf16>
    %cst = arith.constant dense<0.000000e+00> : vector<16x32xf32>
    %2 = tpu.matmul %0, %1, %cst {dimension_numbers = #tpu.dot_dimension_numbers<[1], [0], [0], [1], [0, 0, 1, 1], [], []>} : vector<16x240xbf16>, vector<240x32xbf16>, vector<16x32xf32> -> vector<16x32xf32>
    %c0_3 = arith.constant 0 : index
    %c0_4 = arith.constant 0 : index
    %3 = vector.load %arg6[%c0_3, %c0_4] : memref<8x32xf32, #tpu.memory_space<vmem>>, vector<1x32xf32>
    %4 = vector.broadcast %3 : vector<1x32xf32> to vector<16x32xf32>
    %5 = arith.addf %2, %4 : vector<16x32xf32>
    %c0_5 = arith.constant 0 : index
    %c0_6 = arith.constant 0 : index
    %6 = vector.load %arg3[%c0_5, %c0_6] : memref<16x1xf32, #tpu.memory_space<vmem>>, vector<16x1xf32>
    %7 = vector.broadcast %6 : vector<16x1xf32> to vector<16x32xf32>
    %8 = arith.mulf %5, %7 : vector<16x32xf32>
    %c0_7 = arith.constant 0 : index
    %c0_8 = arith.constant 0 : index
    %9 = vector.load %arg2[%c0_7, %c0_8] : memref<16x32xf32, #tpu.memory_space<vmem>>, vector<16x32xf32>
    %10 = arith.addf %9, %8 : vector<16x32xf32>
    %cst_9 = arith.constant dense<0.000000e+00> : vector<16xf32>
    %11 = vector.multi_reduction <add>, %10, %cst_9 [1] : vector<16x32xf32> to vector<16xf32>
    %12 = vector.shape_cast %11 : vector<16xf32> to vector<16x1xf32>
    %cst_10 = arith.constant 3.200000e+01 : f32
    %13 = vector.broadcast %cst_10 : f32 to vector<16x1xf32>
    %14 = arith.divf %12, %13 : vector<16x1xf32>
    %15 = vector.broadcast %14 : vector<16x1xf32> to vector<16x32xf32>
    %16 = arith.subf %10, %15 : vector<16x32xf32>
    %17 = arith.mulf %16, %16 : vector<16x32xf32>
    %cst_11 = arith.constant dense<0.000000e+00> : vector<16xf32>
    %18 = vector.multi_reduction <add>, %17, %cst_11 [1] : vector<16x32xf32> to vector<16xf32>
    %19 = vector.shape_cast %18 : vector<16xf32> to vector<16x1xf32>
    %cst_12 = arith.constant 3.200000e+01 : f32
    %20 = vector.broadcast %cst_12 : f32 to vector<16x1xf32>
    %21 = arith.divf %19, %20 : vector<16x1xf32>
    %22 = vector.broadcast %14 : vector<16x1xf32> to vector<16x32xf32>
    %23 = arith.subf %10, %22 : vector<16x32xf32>
    %cst_13 = arith.constant 9.99999974E-6 : f32
    %24 = vector.broadcast %cst_13 : f32 to vector<16x1xf32>
    %25 = arith.addf %21, %24 : vector<16x1xf32>
    %26 = math.rsqrt %25 : vector<16x1xf32>
    %27 = vector.broadcast %26 : vector<16x1xf32> to vector<16x32xf32>
    %28 = arith.mulf %23, %27 : vector<16x32xf32>
    %c1 = arith.constant 1 : index
    %c0_14 = arith.constant 0 : index
    %29 = vector.load %arg6[%c1, %c0_14] : memref<8x32xf32, #tpu.memory_space<vmem>>, vector<1x32xf32>
    %30 = vector.broadcast %29 : vector<1x32xf32> to vector<16x32xf32>
    %31 = arith.mulf %28, %30 : vector<16x32xf32>
    %c2 = arith.constant 2 : index
    %c0_15 = arith.constant 0 : index
    %32 = vector.load %arg6[%c2, %c0_15] : memref<8x32xf32, #tpu.memory_space<vmem>>, vector<1x32xf32>
    %33 = vector.broadcast %32 : vector<1x32xf32> to vector<16x32xf32>
    %34 = arith.addf %31, %33 : vector<16x32xf32>
    %35 = arith.truncf %34 : vector<16x32xf32> to vector<16x32xbf16>
    %c0_16 = arith.constant 0 : index
    %c0_17 = arith.constant 0 : index
    %c0_18 = arith.constant 0 : index
    %36 = vector.load %arg5[%c0_16, %c0_17, %c0_18] : memref<3x32x32xbf16, #tpu.memory_space<vmem>>, vector<1x32x32xbf16>
    %37 = vector.shape_cast %36 : vector<1x32x32xbf16> to vector<32x32xbf16>
    %cst_19 = arith.constant dense<0.000000e+00> : vector<16x32xf32>
    %38 = tpu.matmul %35, %37, %cst_19 {dimension_numbers = #tpu.dot_dimension_numbers<[1], [0], [0], [1], [0, 0, 1, 1], [], []>} : vector<16x32xbf16>, vector<32x32xbf16>, vector<16x32xf32> -> vector<16x32xf32>
    %c3 = arith.constant 3 : index
    %c0_20 = arith.constant 0 : index
    %39 = vector.load %arg6[%c3, %c0_20] : memref<8x32xf32, #tpu.memory_space<vmem>>, vector<1x32xf32>
    %40 = vector.broadcast %39 : vector<1x32xf32> to vector<16x32xf32>
    %41 = arith.addf %38, %40 : vector<16x32xf32>
    %cst_21 = arith.constant 0.000000e+00 : f32
    %42 = vector.broadcast %cst_21 : f32 to vector<16x32xf32>
    %43 = arith.maximumf %41, %42 : vector<16x32xf32>
    %44 = arith.truncf %43 : vector<16x32xf32> to vector<16x32xbf16>
    %c1_22 = arith.constant 1 : index
    %c0_23 = arith.constant 0 : index
    %c0_24 = arith.constant 0 : index
    %45 = vector.load %arg5[%c1_22, %c0_23, %c0_24] : memref<3x32x32xbf16, #tpu.memory_space<vmem>>, vector<1x32x32xbf16>
    %46 = vector.shape_cast %45 : vector<1x32x32xbf16> to vector<32x32xbf16>
    %cst_25 = arith.constant dense<0.000000e+00> : vector<16x32xf32>
    %47 = tpu.matmul %44, %46, %cst_25 {dimension_numbers = #tpu.dot_dimension_numbers<[1], [0], [0], [1], [0, 0, 1, 1], [], []>} : vector<16x32xbf16>, vector<32x32xbf16>, vector<16x32xf32> -> vector<16x32xf32>
    %c4 = arith.constant 4 : index
    %c0_26 = arith.constant 0 : index
    %48 = vector.load %arg6[%c4, %c0_26] : memref<8x32xf32, #tpu.memory_space<vmem>>, vector<1x32xf32>
    %49 = vector.broadcast %48 : vector<1x32xf32> to vector<16x32xf32>
    %50 = arith.addf %47, %49 : vector<16x32xf32>
    %cst_27 = arith.constant 0.000000e+00 : f32
    %51 = vector.broadcast %cst_27 : f32 to vector<16x32xf32>
    %52 = arith.maximumf %50, %51 : vector<16x32xf32>
    %53 = arith.truncf %52 : vector<16x32xf32> to vector<16x32xbf16>
    %c2_28 = arith.constant 2 : index
    %c0_29 = arith.constant 0 : index
    %c0_30 = arith.constant 0 : index
    %54 = vector.load %arg5[%c2_28, %c0_29, %c0_30] : memref<3x32x32xbf16, #tpu.memory_space<vmem>>, vector<1x32x32xbf16>
    %55 = vector.shape_cast %54 : vector<1x32x32xbf16> to vector<32x32xbf16>
    %cst_31 = arith.constant dense<0.000000e+00> : vector<16x32xf32>
    %56 = tpu.matmul %53, %55, %cst_31 {dimension_numbers = #tpu.dot_dimension_numbers<[1], [0], [0], [1], [0, 0, 1, 1], [], []>} : vector<16x32xbf16>, vector<32x32xbf16>, vector<16x32xf32> -> vector<16x32xf32>
    %c5 = arith.constant 5 : index
    %c0_32 = arith.constant 0 : index
    %57 = vector.load %arg6[%c5, %c0_32] : memref<8x32xf32, #tpu.memory_space<vmem>>, vector<1x32xf32>
    %58 = vector.broadcast %57 : vector<1x32xf32> to vector<16x32xf32>
    %59 = arith.addf %56, %58 : vector<16x32xf32>
    %60 = arith.addf %34, %59 : vector<16x32xf32>
    %cst_33 = arith.constant dense<0.000000e+00> : vector<16xf32>
    %61 = vector.multi_reduction <add>, %60, %cst_33 [1] : vector<16x32xf32> to vector<16xf32>
    %62 = vector.shape_cast %61 : vector<16xf32> to vector<16x1xf32>
    %cst_34 = arith.constant 3.200000e+01 : f32
    %63 = vector.broadcast %cst_34 : f32 to vector<16x1xf32>
    %64 = arith.divf %62, %63 : vector<16x1xf32>
    %65 = vector.broadcast %64 : vector<16x1xf32> to vector<16x32xf32>
    %66 = arith.subf %60, %65 : vector<16x32xf32>
    %67 = arith.mulf %66, %66 : vector<16x32xf32>
    %cst_35 = arith.constant dense<0.000000e+00> : vector<16xf32>
    %68 = vector.multi_reduction <add>, %67, %cst_35 [1] : vector<16x32xf32> to vector<16xf32>
    %69 = vector.shape_cast %68 : vector<16xf32> to vector<16x1xf32>
    %cst_36 = arith.constant 3.200000e+01 : f32
    %70 = vector.broadcast %cst_36 : f32 to vector<16x1xf32>
    %71 = arith.divf %69, %70 : vector<16x1xf32>
    %72 = vector.broadcast %64 : vector<16x1xf32> to vector<16x32xf32>
    %73 = arith.subf %60, %72 : vector<16x32xf32>
    %cst_37 = arith.constant 9.99999974E-6 : f32
    %74 = vector.broadcast %cst_37 : f32 to vector<16x1xf32>
    %75 = arith.addf %71, %74 : vector<16x1xf32>
    %76 = math.rsqrt %75 : vector<16x1xf32>
    %77 = vector.broadcast %76 : vector<16x1xf32> to vector<16x32xf32>
    %78 = arith.mulf %73, %77 : vector<16x32xf32>
    %c6 = arith.constant 6 : index
    %c0_38 = arith.constant 0 : index
    %79 = vector.load %arg6[%c6, %c0_38] : memref<8x32xf32, #tpu.memory_space<vmem>>, vector<1x32xf32>
    %80 = vector.broadcast %79 : vector<1x32xf32> to vector<16x32xf32>
    %81 = arith.mulf %78, %80 : vector<16x32xf32>
    %c7 = arith.constant 7 : index
    %c0_39 = arith.constant 0 : index
    %82 = vector.load %arg6[%c7, %c0_39] : memref<8x32xf32, #tpu.memory_space<vmem>>, vector<1x32xf32>
    %83 = vector.broadcast %82 : vector<1x32xf32> to vector<16x32xf32>
    %84 = arith.addf %81, %83 : vector<16x32xf32>
    %c0_40 = arith.constant 0 : index
    %c0_41 = arith.constant 0 : index
    %85 = vector.load %arg7[%c0_40, %c0_41] : memref<16x32xf32, #tpu.memory_space<vmem>>, vector<16x32xf32>
    tpu.vector_store %arg7[%c0_40, %c0_41], %84 {strides = array<i32>} : memref<16x32xf32, #tpu.memory_space<vmem>>, vector<16x32xf32>,
    return
  }
  func.func @transform_0(%arg0: i32) -> (i32, i32) {
    %c0_i32 = arith.constant 0 : i32
    %c0_i32_0 = arith.constant 0 : i32
    return %arg0, %c0_i32 : i32, i32
  }
  func.func @transform_1(%arg0: i32) -> (i32, i32) {
    %c0_i32 = arith.constant 0 : i32
    %c0_i32_0 = arith.constant 0 : i32
    return %arg0, %c0_i32 : i32, i32
  }
  func.func @transform_2(%arg0: i32) -> (i32, i32) {
    %c0_i32 = arith.constant 0 : i32
    %c0_i32_0 = arith.constant 0 : i32
    return %arg0, %c0_i32 : i32, i32
  }
  func.func @transform_3(%arg0: i32) -> (i32, i32) {
    %c0_i32 = arith.constant 0 : i32
    %c0_i32_0 = arith.constant 0 : i32
    %c0_i32_1 = arith.constant 0 : i32
    return %c0_i32, %c0_i32_0 : i32, i32
  }
  func.func @transform_4(%arg0: i32) -> (i32, i32, i32) {
    %c0_i32 = arith.constant 0 : i32
    %c0_i32_0 = arith.constant 0 : i32
    %c0_i32_1 = arith.constant 0 : i32
    %c0_i32_2 = arith.constant 0 : i32
    return %c0_i32, %c0_i32_0, %c0_i32_1 : i32, i32, i32
  }
  func.func @transform_5(%arg0: i32) -> (i32, i32) {
    %c0_i32 = arith.constant 0 : i32
    %c0_i32_0 = arith.constant 0 : i32
    %c0_i32_1 = arith.constant 0 : i32
    return %c0_i32, %c0_i32_0 : i32, i32
  }
  func.func @transform_6(%arg0: i32) -> (i32, i32) {
    %c0_i32 = arith.constant 0 : i32
    %c0_i32_0 = arith.constant 0 : i32
    return %arg0, %c0_i32 : i32, i32
  }
}

</mosaic_0001>

<llo_original>
// kernel: ga_block_forward.2
$region0: #{ga_block_forward.2}
  #allocation0 [shape = 'u32[]', space=smem, size = 0x4, offset = 0x4, fixed_abs, tag = 'smem constant byte address 0x4 - core index']
  #allocation1 [shape = 'u32[144,128]{1,0:T(1,128)}', space=vmem, size = 0x12000, scoped, tag = 'internal scratch']
  #allocation2 [shape = 'bf16[8,4,8]{2,1,0:T(4,128)(2,1)}', space=vmem, size = 0x2000, scoped, tag = 'scratch operand']
  %s0 = inlined_call_operand.vmem [shape: bf16[2,4,8,28], index: 0, kind: input, shape index: {}]
  %s1 = inlined_call_operand.vmem [shape: bf16[2,2,4,8,28], index: 1, kind: input, shape index: {}]
  %s2 = inlined_call_operand.vmem [shape: bf16[2,8,8,16], index: 2, kind: input, shape index: {}]
  %s3 = inlined_call_operand.vmem [shape: bf16[2,4,8,8], index: 3, kind: input, shape index: {}]
  %s4 = inlined_call_operand.vmem [shape: f32[2,8,4,16], index: 4, kind: output, shape index: {0}]
  %s5 = inlined_call_operand.vmem [shape: f32[2,4,8,28], index: 5, kind: output, shape index: {1}]
  %6 = xla_tuple %s4, %s5
  %s7 = sld [smem:[#allocation0]]
  $region57: #{ga_block_forward.2} parent=0
    _
  %s9 = ssub.s32 1, %s7
  %s10 = scalar_select 0, %s9, %s7
  loop: start=0, step=1, limit=4
  $region2: #{ga_block_forward.2} parent=0 // loop_pre_header
    _
  $region3: #{ga_block_forward.2} parent=0 // loop_header
    %s12 = sphi 0, %s16
    %p13 = scmp.ge.s32.totalorder %s12, 4
    %s19 = sphi 0, %s31
    %s20 = sphi 0, %s27
    %s21 = sphi 0, %s19
    %s22 = sphi 0, %s20
    %s23 = sphi 0, %s21
    %s24 = sphi 0, %s22
    %s36 = sphi 0, %s38
    %s39 = sphi 0, %s36
    %s40 = sphi 0, %s39
    %s56 = sphi 0, %s40
    %s62 = sphi 0, %s64
    %s65 = sphi 0, %s62
    %s66 = sphi 0, %s65
    %s82 = sphi 0, %s66
    %s90 = sphi 0, %s92
    %s93 = sphi 0, %s90
    %s94 = sphi 0, %s93
    %s110 = sphi 0, %s94
    %s118 = sphi 0, %s120
    %s121 = sphi 0, %s118
    %s122 = sphi 0, %s121
    %s138 = sphi 0, %s122
    %s146 = sphi 0, %s148
    %s149 = sphi 0, %s146
    %s150 = sphi 0, %s149
    %s166 = sphi 0, %s150
    %s174 = sphi 0, %s176
    %s177 = sphi 0, %s174
    %s178 = sphi 0, %s177
    %s194 = sphi 0, %s178
  $region4: #{ga_block_forward.2} parent=0 // loop_header_branch
    %15 = sbr.rel (%p13) target = $region8
  $region5: #{ga_block_forward.2} parent=0 // loop_body
    %s17 = ssub.s32 %s12, 1
    %s18 = ssub.s32 %s12, 2
    %s25 = sadd.s32 1, %s20
    %p26 = scmp.ge.s32.totalorder %s25, 1
    %s27 = scalar_select %p26, 0, %s25
    %s28 = sadd.s32 1, %s19
    %s29 = scalar_select %p26, %s28, %s19
    %p30 = scmp.ge.s32.totalorder %s29, 2
    %s31 = scalar_select %p30, 0, %s29
    %s32 = ssub.s32 %s19, %s31
    %s33 = ssub.s32 %s20, %s27
    %s34 = sor.u32 %s32, %s33
    %p35 = scmp.eq.s32.totalorder %s34, 0
    %s37 = sadd.s32 %s36, 1
    %s38 = scalar_select %p35, %s36, %s37
    %p41 = pneg %p35
    %p42 = scmp.eq.s32.totalorder %s12, 1
    %p43 = por %p41, %p42
    %p44 = scmp.ne.s32.totalorder %s36, %s39
    %p45 = scmp.eq.s32.totalorder %s12, 0
    %p46 = por %p44, %p45
    %p47 = scmp.ne.s32.totalorder %s36, %s39
    %p48 = scmp.eq.s32.totalorder %s17, 1
    %p49 = por %p47, %p48
    %p50 = scmp.ne.s32.totalorder %s39, %s40
    %p51 = scmp.eq.s32.totalorder %s17, 0
    %p52 = por %p50, %p51
    %p53 = scmp.ne.s32.totalorder %s39, %s40
    %p54 = scmp.eq.s32.totalorder %s18, 1
    %p55 = por %p53, %p54
    %p57 = scmp.ne.s32.totalorder %s40, %s56
    %p58 = scmp.eq.s32.totalorder %s18, 0
    %p59 = por %p57, %p58
    %s60 = ssub.s32 %s19, %s31
    %p61 = scmp.eq.s32.totalorder %s60, 0
    %s63 = sadd.s32 %s62, 1
    %s64 = scalar_select %p61, %s62, %s63
    %p67 = pneg %p61
    %p68 = scmp.eq.s32.totalorder %s12, 1
    %p69 = por %p67, %p68
    %p70 = scmp.ne.s32.totalorder %s62, %s65
    %p71 = scmp.eq.s32.totalorder %s12, 0
    %p72 = por %p70, %p71
    %p73 = scmp.ne.s32.totalorder %s62, %s65
    %p74 = scmp.eq.s32.totalorder %s17, 1
    %p75 = por %p73, %p74
    %p76 = scmp.ne.s32.totalorder %s65, %s66
    %p77 = scmp.eq.s32.totalorder %s17, 0
    %p78 = por %p76, %p77
    %p79 = scmp.ne.s32.totalorder %s65, %s66
    %p80 = scmp.eq.s32.totalorder %s18, 1
    %p81 = por %p79, %p80
    %p83 = scmp.ne.s32.totalorder %s66, %s82
    %p84 = scmp.eq.s32.totalorder %s18, 0
    %p85 = por %p83, %p84
    %s86 = ssub.s32 %s19, %s31
    %s87 = ssub.s32 %s20, %s27
    %s88 = sor.u32 %s86, %s87
    %p89 = scmp.eq.s32.totalorder %s88, 0
    %s91 = sadd.s32 %s90, 1
    %s92 = scalar_select %p89, %s90, %s91
    %p95 = pneg %p89
    %p96 = scmp.eq.s32.totalorder %s12, 1
    %p97 = por %p95, %p96
    %p98 = scmp.ne.s32.totalorder %s90, %s93
    %p99 = scmp.eq.s32.totalorder %s12, 0
    %p100 = por %p98, %p99
    %p101 = scmp.ne.s32.totalorder %s90, %s93
    %p102 = scmp.eq.s32.totalorder %s17, 1
    %p103 = por %p101, %p102
    %p104 = scmp.ne.s32.totalorder %s93, %s94
    %p105 = scmp.eq.s32.totalorder %s17, 0
    %p106 = por %p104, %p105
    %p107 = scmp.ne.s32.totalorder %s93, %s94
    %p108 = scmp.eq.s32.totalorder %s18, 1
    %p109 = por %p107, %p108
    %p111 = scmp.ne.s32.totalorder %s94, %s110
    %p112 = scmp.eq.s32.totalorder %s18, 0
    %p113 = por %p111, %p112
    %s114 = ssub.s32 %s19, %s31
    %s115 = ssub.s32 %s20, %s27
    %s116 = sor.u32 %s114, %s115
    %p117 = scmp.eq.s32.totalorder %s116, 0
    %s119 = sadd.s32 %s118, 1
    %s120 = scalar_select %p117, %s118, %s119
    %p123 = pneg %p117
    %p124 = scmp.eq.s32.totalorder %s12, 1
    %p125 = por %p123, %p124
    %p126 = scmp.ne.s32.totalorder %s118, %s121
    %p127 = scmp.eq.s32.totalorder %s12, 0
    %p128 = por %p126, %p127
    %p129 = scmp.ne.s32.totalorder %s118, %s121
    %p130 = scmp.eq.s32.totalorder %s17, 1
    %p131 = por %p129, %p130
    %p132 = scmp.ne.s32.totalorder %s121, %s122
    %p133 = scmp.eq.s32.totalorder %s17, 0
    %p134 = por %p132, %p133
    %p135 = scmp.ne.s32.totalorder %s121, %s122
    %p136 = scmp.eq.s32.totalorder %s18, 1
    %p137 = por %p135, %p136
    %p139 = scmp.ne.s32.totalorder %s122, %s138
    %p140 = scmp.eq.s32.totalorder %s18, 0
    %p141 = por %p139, %p140
    %s142 = ssub.s32 %s19, %s31
    %s143 = ssub.s32 %s20, %s27
    %s144 = sor.u32 %s142, %s143
    %p145 = scmp.eq.s32.totalorder %s144, 0
    %s147 = sadd.s32 %s146, 1
    %s148 = scalar_select %p145, %s146, %s147
    %p151 = pneg %p145
    %p152 = scmp.eq.s32.totalorder %s12, 1
    %p153 = por %p151, %p152
    %p154 = scmp.ne.s32.totalorder %s146, %s149
    %p155 = scmp.eq.s32.totalorder %s12, 0
    %p156 = por %p154, %p155
    %p157 = scmp.ne.s32.totalorder %s146, %s149
    %p158 = scmp.eq.s32.totalorder %s17, 1
    %p159 = por %p157, %p158
    %p160 = scmp.ne.s32.totalorder %s149, %s150
    %p161 = scmp.eq.s32.totalorder %s17, 0
    %p162 = por %p160, %p161
    %p163 = scmp.ne.s32.totalorder %s149, %s150
    %p164 = scmp.eq.s32.totalorder %s18, 1
    %p165 = por %p163, %p164
    %p167 = scmp.ne.s32.totalorder %s150, %s166
    %p168 = scmp.eq.s32.totalorder %s18, 0
    %p169 = por %p167, %p168
    %s170 = ssub.s32 %s19, %s31
    %s171 = ssub.s32 %s20, %s27
    %s172 = sor.u32 %s170, %s171
    %p173 = scmp.eq.s32.totalorder %s172, 0
    %s175 = sadd.s32 %s174, 1
    %s176 = scalar_select %p173, %s174, %s175
    %p179 = pneg %p173
    %p180 = scmp.eq.s32.totalorder %s12, 1
    %p181 = por %p179, %p180
    %p182 = scmp.ne.s32.totalorder %s174, %s177
    %p183 = scmp.eq.s32.totalorder %s12, 0
    %p184 = por %p182, %p183
    %p185 = scmp.ne.s32.totalorder %s174, %s177
    %p186 = scmp.eq.s32.totalorder %s17, 1
    %p187 = por %p185, %p186
    %p188 = scmp.ne.s32.totalorder %s177, %s178
    %p189 = scmp.eq.s32.totalorder %s17, 0
    %p190 = por %p188, %p189
    %p191 = scmp.ne.s32.totalorder %s177, %s178
    %p192 = scmp.eq.s32.totalorder %s18, 1
    %p193 = por %p191, %p192
    %p195 = scmp.ne.s32.totalorder %s178, %s194
    %p196 = scmp.eq.s32.totalorder %s18, 0
    %p197 = por %p195, %p196
    %p198 = scmp.le.s32.totalorder 1, %s12
    %p199 = scmp.lt.s32.totalorder %s12, 3
    %p200 = pnand %p198, %p199
    %p201 = pneg %p200
    // Predicated region
    $region9: #{ga_block_forward.2} parent=5 // pred_check
      _
    $region10: #{ga_block_forward.2} parent=5 // pred_check_branch
      %203 = sbr.rel (%p200) target = $region12
    $region11: #{ga_block_forward.2} parent=5 // pred_region
      %s204 = ssub.s32 %s12, 1
    $region12: #{ga_block_forward.2} parent=5 // pred_fallthru
      _
    %p205 = scmp.lt.s32.totalorder %s12, 2
    // Predicated region
    $region13: #{ga_block_forward.2} parent=5 // pred_check
      %p206 = pneg %p205
    $region14: #{ga_block_forward.2} parent=5 // pred_check_branch
      %208 = sbr.rel (%p206) target = $region16
    $region15: #{ga_block_forward.2} parent=5 // pred_region
      // Predicated region
      $region17: #{ga_block_forward.2} parent=15 // pred_check
        %p209 = pneg %p46
      $region18: #{ga_block_forward.2} parent=15 // pred_check_branch
        %211 = sbr.rel (%p209) target = $region20
      $region19: #{ga_block_forward.2} parent=15 // pred_region
        %p212 = scmp.lt.s32.totalorder %s19, 1
        %s213 = scalar_select %p212, %s19, 1
        %p214 = scmp.lt.s32.totalorder %s20, 0
        %s215 = scalar_select %p214, %s20, 0
        %s216 = smul.addr %s213, 4
        %s217 = sadd.s32 %s215, %s216
        %s218 = smul.addr %s217, 4
        %s219 = scalar_lea.vmem %s0, %s218
      $region20: #{ga_block_forward.2} parent=15 // pred_fallthru
        _
      // Predicated region
      $region21: #{ga_block_forward.2} parent=15 // pred_check
        %p220 = pneg %p72
      $region22: #{ga_block_forward.2} parent=15 // pred_check_branch
        %222 = sbr.rel (%p220) target = $region24
      $region23: #{ga_block_forward.2} parent=15 // pred_region
        %p223 = scmp.lt.s32.totalorder %s19, 1
        %s224 = scalar_select %p223, %s19, 1
        %s225 = smul.addr %s224, 8
        %s226 = smul.addr %s225, 4
        %s227 = scalar_lea.vmem %s1, %s226
      $region24: #{ga_block_forward.2} parent=15 // pred_fallthru
        _
      // Predicated region
      $region25: #{ga_block_forward.2} parent=15 // pred_check
        %p228 = pneg %p100
      $region26: #{ga_block_forward.2} parent=15 // pred_check_branch
        %230 = sbr.rel (%p228) target = $region28
      $region27: #{ga_block_forward.2} parent=15 // pred_region
        %s231 = smul.u32 8, %s20
        %p232 = scmp.lt.s32.totalorder %s19, 1
        %s233 = scalar_select %p232, %s19, 1
        %p234 = scmp.lt.s32.totalorder %s231, 7
        %s235 = scalar_select %p234, %s231, 7
        %s236 = smul.addr %s233, 8
        %s237 = sadd.s32 %s235, %s236
        %s238 = smul.addr %s237, 4
        %s239 = scalar_lea.vmem %s2, %s238
        %s240 = smul.u32 8, %s20
      $region28: #{ga_block_forward.2} parent=15 // pred_fallthru
        _
      // Predicated region
      $region29: #{ga_block_forward.2} parent=15 // pred_check
        %p241 = pneg %p128
      $region30: #{ga_block_forward.2} parent=15 // pred_check_branch
        %243 = sbr.rel (%p241) target = $region32
      $region31: #{ga_block_forward.2} parent=15 // pred_region
        %p244 = scmp.lt.s32.totalorder %s19, 1
        %s245 = scalar_select %p244, %s19, 1
        %p246 = scmp.lt.s32.totalorder %s20, 0
        %s247 = scalar_select %p246, %s20, 0
        %s248 = smul.addr %s245, 4
        %s249 = sadd.s32 %s247, %s248
        %s250 = smul.addr %s249, 4
        %s251 = scalar_lea.vmem %s3, %s250
      $region32: #{ga_block_forward.2} parent=15 // pred_fallthru
        _
    $region16: #{ga_block_forward.2} parent=5 // pred_fallthru
      _
    %p252 = scmp.le.s32.totalorder 1, %s12
    %p253 = scmp.lt.s32.totalorder %s12, 3
    %p254 = pnand %p252, %p253
    %p255 = pneg %p254
    // Predicated region
    $region33: #{ga_block_forward.2} parent=5 // pred_check
      _
    $region34: #{ga_block_forward.2} parent=5 // pred_check_branch
      %257 = sbr.rel (%p254) target = $region36
    $region35: #{ga_block_forward.2} parent=5 // pred_region
      %s258 = ssub.s32 %s12, 1
      %p259 = scmp.lt.s32.totalorder %s21, 1
      %s260 = scalar_select %p259, %s21, 1
      %p261 = scmp.lt.s32.totalorder %s22, 0
      %s262 = scalar_select %p261, %s22, 0
      %s263 = smul.addr %s260, 4
      %s264 = sadd.s32 %s262, %s263
      %s265 = smul.addr %s264, 4
      %s266 = scalar_lea.vmem %s0, %s265
      %p267 = pneg %p52
      %p268 = pneg %p49
      %p269 = scmp.lt.s32.totalorder %s21, 1
      %s270 = scalar_select %p269, %s21, 1
      %s271 = smul.addr %s270, 8
      %s272 = smul.addr %s271, 4
      %s273 = scalar_lea.vmem %s1, %s272
      %p274 = pneg %p78
      %p275 = pneg %p75
      %s276 = smul.u32 8, %s22
      %p277 = scmp.lt.s32.totalorder %s21, 1
      %s278 = scalar_select %p277, %s21, 1
      %p279 = scmp.lt.s32.totalorder %s276, 7
      %s280 = scalar_select %p279, %s276, 7
      %s281 = smul.addr %s278, 8
      %s282 = sadd.s32 %s280, %s281
      %s283 = smul.addr %s282, 4
      %s284 = scalar_lea.vmem %s2, %s283
      %p285 = pneg %p106
      %p286 = pneg %p103
      %p287 = scmp.lt.s32.totalorder %s21, 1
      %s288 = scalar_select %p287, %s21, 1
      %p289 = scmp.lt.s32.totalorder %s22, 0
      %s290 = scalar_select %p289, %s22, 0
      %s291 = smul.addr %s288, 4
      %s292 = sadd.s32 %s290, %s291
      %s293 = smul.addr %s292, 4
      %s294 = scalar_lea.vmem %s3, %s293
      %p295 = pneg %p134
      %p296 = pneg %p131
      %p297 = pneg %p162
      %p298 = pneg %p159
      %s299 = smul.u32 8, %s22
      %p300 = scmp.lt.s32.totalorder %s21, 1
      %s301 = scalar_select %p300, %s21, 1
      %p302 = scmp.lt.s32.totalorder %s299, 7
      %s303 = scalar_select %p302, %s299, 7
      %s304 = smul.addr %s301, 8
      %s305 = sadd.s32 %s303, %s304
      %s306 = smul.addr %s305, 4
      %s307 = scalar_lea.vmem %s4, %s306
      %p308 = pneg %p190
      %p309 = pneg %p187
      %p310 = scmp.lt.s32.totalorder %s21, 1
      %s311 = scalar_select %p310, %s21, 1
      %p312 = scmp.lt.s32.totalorder %s22, 0
      %s313 = scalar_select %p312, %s22, 0
      %s314 = smul.addr %s311, 4
      %s315 = sadd.s32 %s313, %s314
      %s316 = smul.addr %s315, 8
      %s317 = scalar_lea.vmem %s5, %s316
      %p318 = scmp.lt.s32.totalorder %s21, 1
      %s319 = scalar_select %p318, %s21, 1
      %p320 = scmp.lt.s32.totalorder %s22, 0
      %s321 = scalar_select %p320, %s22, 0
      %s322 = smul.addr %s319, 4
      %s323 = sadd.s32 %s321, %s322
      %s324 = smul.addr %s323, 4
      %s325 = scalar_lea.vmem %s0, %s324
      %p326 = scmp.lt.s32.totalorder %s21, 1
      %s327 = scalar_select %p326, %s21, 1
      %s328 = smul.addr %s327, 8
      %s329 = smul.addr %s328, 4
      %s330 = scalar_lea.vmem %s1, %s329
      %s331 = smul.u32 8, %s22
      %p332 = scmp.lt.s32.totalorder %s21, 1
      %s333 = scalar_select %p332, %s21, 1
      %p334 = scmp.lt.s32.totalorder %s331, 7
      %s335 = scalar_select %p334, %s331, 7
      %s336 = smul.addr %s333, 8
      %s337 = sadd.s32 %s335, %s336
      %s338 = smul.addr %s337, 4
      %s339 = scalar_lea.vmem %s2, %s338
      %s340 = smul.u32 8, %s22
      %p341 = scmp.lt.s32.totalorder %s21, 1
      %s342 = scalar_select %p341, %s21, 1
      %p343 = scmp.lt.s32.totalorder %s22, 0
      %s344 = scalar_select %p343, %s22, 0
      %s345 = smul.addr %s342, 4
      %s346 = sadd.s32 %s344, %s345
      %s347 = smul.addr %s346, 4
      %s348 = scalar_lea.vmem %s3, %s347
      %s349 = smul.u32 8, %s22
      %p350 = scmp.lt.s32.totalorder %s21, 1
      %s351 = scalar_select %p350, %s21, 1
      %p352 = scmp.lt.s32.totalorder %s349, 7
      %s353 = scalar_select %p352, %s349, 7
      %s354 = smul.addr %s351, 8
      %s355 = sadd.s32 %s353, %s354
      %s356 = smul.addr %s355, 4
      %s357 = scalar_lea.vmem %s4, %s356
      %s358 = smul.u32 8, %s22
      %p359 = scmp.lt.s32.totalorder %s21, 1
      %s360 = scalar_select %p359, %s21, 1
      %p361 = scmp.lt.s32.totalorder %s22, 0
      %s362 = scalar_select %p361, %s22, 0
      %s363 = smul.addr %s360, 4
      %s364 = sadd.s32 %s362, %s363
      %s365 = smul.addr %s364, 8
      %s366 = scalar_lea.vmem %s5, %s365
      %v368 = vld [vmem:[%s325] sm:$0xf]
      %v369 = vld [vmem:[%s325 + $0x4] sm:$0xf]
      %v370 = vld [vmem:[%s325 + $0x8] sm:$0xf]
      %v371 = vld [vmem:[%s325 + $0xc] sm:$0xf]
      %v372 = vld [vmem:[%s330] sm:$0xf]
      %v373 = vld [vmem:[%s330 + $0x4] sm:$0xf]
      %v374 = vld [vmem:[%s330 + $0x8] sm:$0xf]
      %v375 = vld [vmem:[%s330 + $0xc] sm:$0xf]
      %s376 = scalar_lea.vmem %s330, 16
      %v377 = vld [vmem:[%s376] sm:$0xf]
      %v378 = vld [vmem:[%s376 + $0x4] sm:$0xf]
      %v379 = vld [vmem:[%s376 + $0x8] sm:$0xf]
      %v380 = vld [vmem:[%s376 + $0xc] sm:$0xf]
      %v381 = vld [vmem:[%s348] sm:$0xf]
      %v382 = vld [vmem:[%s348 + $0x4] sm:$0xf]
      %v383 = vld [vmem:[%s348 + $0x8] sm:$0xf]
      %v384 = vld [vmem:[%s348 + $0xc] sm:$0xf]
      %v385 = vunpack.c.l.bf16 %v381
      %v386 = vunpack.c.l.bf16 %v382
      %v387 = vunpack.c.l.bf16 %v383
      %v388 = vunpack.c.l.bf16 %v384
      %vm389 = vcmask 228352
      %v391 = vsel %vm389, %v368, 0
      %v394 = vsel %vm389, %v372, 0
      %396 = vmatprep.subr.bf16.mxu0 0
      %397 = vmatpush1.bf16.xpose.msra.mxu0 %v394
      %398 = vmatprep.subr.bf16.mxu0 0
      %399 = vmatpush1.bf16.xpose.msra.mxu0 0
      %400 = vmatprep.subr.bf16.mxu0 0
      %401 = vmatpush1.bf16.xpose.msra.mxu0 0
      %402 = vmatprep.subr.bf16.mxu0 0
      %403 = vmatpush1.bf16.xpose.msra.mxu0 0
      %404 = vmatprep.subr.bf16.mxu0 0
      %405 = vmatpush1.bf16.xpose.msra.mxu0 0
      %406 = vmatprep.subr.bf16.mxu0 0
      %407 = vmatpush1.bf16.xpose.msra.mxu0 0
      %408 = vmatprep.subr.bf16.mxu0 0
      %409 = vmatpush1.bf16.xpose.msra.mxu0 0
      %410 = vmatprep.subr.bf16.mxu0 0
      %411 = vmatpush1.bf16.xpose.msra.mxu0 0
      %412 = vmatprep.subr.bf16.mxu0 0
      %413 = vmatpush1.bf16.xpose.msra.mxu0 0
      %414 = vmatprep.subr.bf16.mxu0 0
      %415 = vmatpush1.bf16.xpose.msra.mxu0 0
      %416 = vmatprep.subr.bf16.mxu0 0
      %417 = vmatpush1.bf16.xpose.msra.mxu0 0
      %418 = vmatprep.subr.bf16.mxu0 0
      %419 = vmatpush1.bf16.xpose.msra.mxu0 0
      %420 = vmatprep.subr.bf16.mxu0 0
      %421 = vmatpush1.bf16.xpose.msra.mxu0 0
      %422 = vmatprep.subr.bf16.mxu0 0
      %423 = vmatpush1.bf16.xpose.msra.mxu0 0
      %424 = vmatprep.subr.bf16.mxu0 0
      %425 = vmatpush1.bf16.xpose.msra.mxu0 0
      %426 = vmatprep.subr.bf16.mxu0 0
      %427 = vmatpush1.bf16.xpose.msra.mxu0 0
      %428 = vmatprep.mubr.bf16.mxu0 0
      %429 = vmatmul.mubr.bf16.gmra.mrb[0].mxu0 %v391
      %v430 = vpop.f32.mrb[0].mxu0
      %v431 = vadd.f32 %v385, %v430
      %v432 = vpop.f32.mrb[0].mxu0
      %v433 = vpop.f32.mrb[0].mxu0
      %v434 = vpop.f32.mrb[0].mxu0
      %435 = vdwg.mxu0
      %v437 = vsel %vm389, %v369, 0
      %v440 = vsel %vm389, %v373, 0
      %442 = vmatprep.subr.bf16.mxu0 0
      %443 = vmatpush1.bf16.xpose.msra.mxu0 %v440
      %444 = vmatprep.subr.bf16.mxu0 0
      %445 = vmatpush1.bf16.xpose.msra.mxu0 0
      %446 = vmatprep.subr.bf16.mxu0 0
      %447 = vmatpush1.bf16.xpose.msra.mxu0 0
      %448 = vmatprep.subr.bf16.mxu0 0
      %449 = vmatpush1.bf16.xpose.msra.mxu0 0
      %450 = vmatprep.subr.bf16.mxu0 0
      %451 = vmatpush1.bf16.xpose.msra.mxu0 0
      %452 = vmatprep.subr.bf16.mxu0 0
      %453 = vmatpush1.bf16.xpose.msra.mxu0 0
      %454 = vmatprep.subr.bf16.mxu0 0
      %455 = vmatpush1.bf16.xpose.msra.mxu0 0
      %456 = vmatprep.subr.bf16.mxu0 0
      %457 = vmatpush1.bf16.xpose.msra.mxu0 0
      %458 = vmatprep.subr.bf16.mxu0 0
      %459 = vmatpush1.bf16.xpose.msra.mxu0 0
      %460 = vmatprep.subr.bf16.mxu0 0
      %461 = vmatpush1.bf16.xpose.msra.mxu0 0
      %462 = vmatprep.subr.bf16.mxu0 0
      %463 = vmatpush1.bf16.xpose.msra.mxu0 0
      %464 = vmatprep.subr.bf16.mxu0 0
      %465 = vmatpush1.bf16.xpose.msra.mxu0 0
      %466 = vmatprep.subr.bf16.mxu0 0
      %467 = vmatpush1.bf16.xpose.msra.mxu0 0
      %468 = vmatprep.subr.bf16.mxu0 0
      %469 = vmatpush1.bf16.xpose.msra.mxu0 0
      %470 = vmatprep.subr.bf16.mxu0 0
      %471 = vmatpush1.bf16.xpose.msra.mxu0 0
      %472 = vmatprep.subr.bf16.mxu0 0
      %473 = vmatpush1.bf16.xpose.msra.mxu0 0
      %474 = vmatprep.mubr.bf16.mxu0 0
      %475 = vmatmul.mubr.bf16.gmra.mrb[0].mxu0 %v437
      %v476 = vpop.f32.mrb[0].mxu0
      %v477 = vadd.f32 %v386, %v476
      %v478 = vpop.f32.mrb[0].mxu0
      %v479 = vpop.f32.mrb[0].mxu0
      %v480 = vpop.f32.mrb[0].mxu0
      %481 = vdwg.mxu0
      %v483 = vsel %vm389, %v370, 0
      %v486 = vsel %vm389, %v374, 0
      %488 = vmatprep.subr.bf16.mxu0 0
      %489 = vmatpush1.bf16.xpose.msra.mxu0 %v486
      %490 = vmatprep.subr.bf16.mxu0 0
      %491 = vmatpush1.bf16.xpose.msra.mxu0 0
      %492 = vmatprep.subr.bf16.mxu0 0
      %493 = vmatpush1.bf16.xpose.msra.mxu0 0
      %494 = vmatprep.subr.bf16.mxu0 0
      %495 = vmatpush1.bf16.xpose.msra.mxu0 0
      %496 = vmatprep.subr.bf16.mxu0 0
      %497 = vmatpush1.bf16.xpose.msra.mxu0 0
      %498 = vmatprep.subr.bf16.mxu0 0
      %499 = vmatpush1.bf16.xpose.msra.mxu0 0
      %500 = vmatprep.subr.bf16.mxu0 0
      %501 = vmatpush1.bf16.xpose.msra.mxu0 0
      %502 = vmatprep.subr.bf16.mxu0 0
      %503 = vmatpush1.bf16.xpose.msra.mxu0 0
      %504 = vmatprep.subr.bf16.mxu0 0
      %505 = vmatpush1.bf16.xpose.msra.mxu0 0
      %506 = vmatprep.subr.bf16.mxu0 0
      %507 = vmatpush1.bf16.xpose.msra.mxu0 0
      %508 = vmatprep.subr.bf16.mxu0 0
      %509 = vmatpush1.bf16.xpose.msra.mxu0 0
      %510 = vmatprep.subr.bf16.mxu0 0
      %511 = vmatpush1.bf16.xpose.msra.mxu0 0
      %512 = vmatprep.subr.bf16.mxu0 0
      %513 = vmatpush1.bf16.xpose.msra.mxu0 0
      %514 = vmatprep.subr.bf16.mxu0 0
      %515 = vmatpush1.bf16.xpose.msra.mxu0 0
      %516 = vmatprep.subr.bf16.mxu0 0
      %517 = vmatpush1.bf16.xpose.msra.mxu0 0
      %518 = vmatprep.subr.bf16.mxu0 0
      %519 = vmatpush1.bf16.xpose.msra.mxu0 0
      %520 = vmatprep.mubr.bf16.mxu0 0
      %521 = vmatmul.mubr.bf16.gmra.mrb[0].mxu0 %v483
      %v522 = vpop.f32.mrb[0].mxu0
      %v523 = vadd.f32 %v387, %v522
      %v524 = vpop.f32.mrb[0].mxu0
      %v525 = vpop.f32.mrb[0].mxu0
      %v526 = vpop.f32.mrb[0].mxu0
      %527 = vdwg.mxu0
      %v529 = vsel %vm389, %v371, 0
      %v532 = vsel %vm389, %v375, 0
      %534 = vmatprep.subr.bf16.mxu0 0
      %535 = vmatpush1.bf16.xpose.msra.mxu0 %v532
      %536 = vmatprep.subr.bf16.mxu0 0
      %537 = vmatpush1.bf16.xpose.msra.mxu0 0
      %538 = vmatprep.subr.bf16.mxu0 0
      %539 = vmatpush1.bf16.xpose.msra.mxu0 0
      %540 = vmatprep.subr.bf16.mxu0 0
      %541 = vmatpush1.bf16.xpose.msra.mxu0 0
      %542 = vmatprep.subr.bf16.mxu0 0
      %543 = vmatpush1.bf16.xpose.msra.mxu0 0
      %544 = vmatprep.subr.bf16.mxu0 0
      %545 = vmatpush1.bf16.xpose.msra.mxu0 0
      %546 = vmatprep.subr.bf16.mxu0 0
      %547 = vmatpush1.bf16.xpose.msra.mxu0 0
      %548 = vmatprep.subr.bf16.mxu0 0
      %549 = vmatpush1.bf16.xpose.msra.mxu0 0
      %550 = vmatprep.subr.bf16.mxu0 0
      %551 = vmatpush1.bf16.xpose.msra.mxu0 0
      %552 = vmatprep.subr.bf16.mxu0 0
      %553 = vmatpush1.bf16.xpose.msra.mxu0 0
      %554 = vmatprep.subr.bf16.mxu0 0
      %555 = vmatpush1.bf16.xpose.msra.mxu0 0
      %556 = vmatprep.subr.bf16.mxu0 0
      %557 = vmatpush1.bf16.xpose.msra.mxu0 0
      %558 = vmatprep.subr.bf16.mxu0 0
      %559 = vmatpush1.bf16.xpose.msra.mxu0 0
      %560 = vmatprep.subr.bf16.mxu0 0
      %561 = vmatpush1.bf16.xpose.msra.mxu0 0
      %562 = vmatprep.subr.bf16.mxu0 0
      %563 = vmatpush1.bf16.xpose.msra.mxu0 0
      %564 = vmatprep.subr.bf16.mxu0 0
      %565 = vmatpush1.bf16.xpose.msra.mxu0 0
      %566 = vmatprep.mubr.bf16.mxu0 0
      %567 = vmatmul.mubr.bf16.gmra.mrb[0].mxu0 %v529
      %v568 = vpop.f32.mrb[0].mxu0
      %v569 = vadd.f32 %v388, %v568
      %v570 = vpop.f32.mrb[0].mxu0
      %v571 = vpop.f32.mrb[0].mxu0
      %v572 = vpop.f32.mrb[0].mxu0
      %573 = vdwg.mxu0
      %vm574 = vcmask 64512
      %v575 = vsel %vm574, %v431, -inf
      %576 = vmax.xlane.f32.xlu0 %v575
      %v577 = vpop.xlane.xlu0 %576
      %v578 = vsel %vm574, %v477, -inf
      %579 = vmax.xlane.f32.xlu0 %v578
      %v580 = vpop.xlane.xlu0 %579
      %v581 = vsel %vm574, %v523, -inf
      %582 = vmax.xlane.f32.xlu0 %v581
      %v583 = vpop.xlane.xlu0 %582
      %v584 = vsel %vm574, %v569, -inf
      %585 = vmax.xlane.f32.xlu0 %v584
      %v586 = vpop.xlane.xlu0 %585
      %v587 = vsub.f32 %v431, %v577
      %v588 = vsub.f32 %v477, %v580
      %v589 = vsub.f32 %v523, %v583
      %v590 = vsub.f32 %v569, %v586
      %v591 = vpack.c.bf16 %v587, %v587
      %v592 = vpack.c.bf16 %v588, %v588
      %v593 = vpack.c.bf16 %v589, %v589
      %v594 = vpack.c.bf16 %v590, %v590
      %v596 = vmul.bf16 %v591, 1069105081
      %v597 = vpow.bf16.pop %v596
      %v599 = vmul.bf16 %v592, 1069105081
      %v600 = vpow.bf16.pop %v599
      %v602 = vmul.bf16 %v593, 1069105081
      %v603 = vpow.bf16.pop %v602
      %v605 = vmul.bf16 %v594, 1069105081
      %v606 = vpow.bf16.pop %v605
      %v607 = vunpack.c.l.bf16 %v597
      %v608 = vunpack.c.l.bf16 %v600
      %v609 = vunpack.c.l.bf16 %v603
      %v610 = vunpack.c.l.bf16 %v606
      %v611 = vsel %vm574, %v607, 0.0
      %612 = vadd.xlane.f32.xlu0 %v611
      %v613 = vpop.xlane.xlu0 %612
      %v614 = vsel %vm574, %v608, 0.0
      %615 = vadd.xlane.f32.xlu0 %v614
      %v616 = vpop.xlane.xlu0 %615
      %v617 = vsel %vm574, %v609, 0.0
      %618 = vadd.xlane.f32.xlu0 %v617
      %v619 = vpop.xlane.xlu0 %618
      %v620 = vsel %vm574, %v610, 0.0
      %621 = vadd.xlane.f32.xlu0 %v620
      %v622 = vpop.xlane.xlu0 %621
      %v623 = vrcp.pop %v613
      %v624 = vrcp.pop %v616
      %v625 = vrcp.pop %v619
      %v626 = vrcp.pop %v622
      %v627 = vpack.c.bf16 %v623, %v623
      %v628 = vpack.c.bf16 %v624, %v624
      %v629 = vpack.c.bf16 %v625, %v625
      %v630 = vpack.c.bf16 %v626, %v626
      %v631 = vmul.bf16 %v597, %v627
      %v632 = vmul.bf16 %v600, %v628
      %v633 = vmul.bf16 %v603, %v629
      %v634 = vmul.bf16 %v606, %v630
      %v636 = vsel %vm574, %v631, 0
      %vm638 = vcmask 1043456
      %v640 = vsel %vm638, %v377, 0
      %642 = vmatprep.subr.bf16.mxu0 0
      %643 = vmatpush1.bf16.msra.mxu0 %v640
      %644 = vmatprep.subr.bf16.mxu0 0
      %645 = vmatpush1.bf16.msra.mxu0 0
      %646 = vmatprep.subr.bf16.mxu0 0
      %647 = vmatpush1.bf16.msra.mxu0 0
      %648 = vmatprep.subr.bf16.mxu0 0
      %649 = vmatpush1.bf16.msra.mxu0 0
      %650 = vmatprep.subr.bf16.mxu0 0
      %651 = vmatpush1.bf16.msra.mxu0 0
      %652 = vmatprep.subr.bf16.mxu0 0
      %653 = vmatpush1.bf16.msra.mxu0 0
      %654 = vmatprep.subr.bf16.mxu0 0
      %655 = vmatpush1.bf16.msra.mxu0 0
      %656 = vmatprep.subr.bf16.mxu0 0
      %657 = vmatpush1.bf16.msra.mxu0 0
      %658 = vmatprep.subr.bf16.mxu0 0
      %659 = vmatpush1.bf16.msra.mxu0 0
      %660 = vmatprep.subr.bf16.mxu0 0
      %661 = vmatpush1.bf16.msra.mxu0 0
      %662 = vmatprep.subr.bf16.mxu0 0
      %663 = vmatpush1.bf16.msra.mxu0 0
      %664 = vmatprep.subr.bf16.mxu0 0
      %665 = vmatpush1.bf16.msra.mxu0 0
      %666 = vmatprep.subr.bf16.mxu0 0
      %667 = vmatpush1.bf16.msra.mxu0 0
      %668 = vmatprep.subr.bf16.mxu0 0
      %669 = vmatpush1.bf16.msra.mxu0 0
      %670 = vmatprep.subr.bf16.mxu0 0
      %671 = vmatpush1.bf16.msra.mxu0 0
      %672 = vmatprep.subr.bf16.mxu0 0
      %673 = vmatpush1.bf16.msra.mxu0 0
      %674 = vmatprep.mubr.bf16.mxu0 0
      %675 = vmatmul.mubr.bf16.gmra.mrb[0].mxu0 %v636
      %v676 = vpop.f32.mrb[0].mxu0
      %v677 = vadd.f32 0.0, %v676
      %v678 = vpop.f32.mrb[0].mxu0
      %v679 = vpop.f32.mrb[0].mxu0
      %v680 = vpop.f32.mrb[0].mxu0
      %681 = vdwg.mxu0
      %v683 = vsel %vm574, %v632, 0
      %v686 = vsel %vm638, %v378, 0
      %688 = vmatprep.subr.bf16.mxu0 0
      %689 = vmatpush1.bf16.msra.mxu0 %v686
      %690 = vmatprep.subr.bf16.mxu0 0
      %691 = vmatpush1.bf16.msra.mxu0 0
      %692 = vmatprep.subr.bf16.mxu0 0
      %693 = vmatpush1.bf16.msra.mxu0 0
      %694 = vmatprep.subr.bf16.mxu0 0
      %695 = vmatpush1.bf16.msra.mxu0 0
      %696 = vmatprep.subr.bf16.mxu0 0
      %697 = vmatpush1.bf16.msra.mxu0 0
      %698 = vmatprep.subr.bf16.mxu0 0
      %699 = vmatpush1.bf16.msra.mxu0 0
      %700 = vmatprep.subr.bf16.mxu0 0
      %701 = vmatpush1.bf16.msra.mxu0 0
      %702 = vmatprep.subr.bf16.mxu0 0
      %703 = vmatpush1.bf16.msra.mxu0 0
      %704 = vmatprep.subr.bf16.mxu0 0
      %705 = vmatpush1.bf16.msra.mxu0 0
      %706 = vmatprep.subr.bf16.mxu0 0
      %707 = vmatpush1.bf16.msra.mxu0 0
      %708 = vmatprep.subr.bf16.mxu0 0
      %709 = vmatpush1.bf16.msra.mxu0 0
      %710 = vmatprep.subr.bf16.mxu0 0
      %711 = vmatpush1.bf16.msra.mxu0 0
      %712 = vmatprep.subr.bf16.mxu0 0
      %713 = vmatpush1.bf16.msra.mxu0 0
      %714 = vmatprep.subr.bf16.mxu0 0
      %715 = vmatpush1.bf16.msra.mxu0 0
      %716 = vmatprep.subr.bf16.mxu0 0
      %717 = vmatpush1.bf16.msra.mxu0 0
      %718 = vmatprep.subr.bf16.mxu0 0
      %719 = vmatpush1.bf16.msra.mxu0 0
      %720 = vmatprep.mubr.bf16.mxu0 0
      %721 = vmatmul.mubr.bf16.gmra.mrb[0].mxu0 %v683
      %v722 = vpop.f32.mrb[0].mxu0
      %v723 = vadd.f32 0.0, %v722
      %v724 = vpop.f32.mrb[0].mxu0
      %v725 = vpop.f32.mrb[0].mxu0
      %v726 = vpop.f32.mrb[0].mxu0
      %727 = vdwg.mxu0
      %v729 = vsel %vm574, %v633, 0
      %v732 = vsel %vm638, %v379, 0
      %734 = vmatprep.subr.bf16.mxu0 0
      %735 = vmatpush1.bf16.msra.mxu0 %v732
      %736 = vmatprep.subr.bf16.mxu0 0
      %737 = vmatpush1.bf16.msra.mxu0 0
      %738 = vmatprep.subr.bf16.mxu0 0
      %739 = vmatpush1.bf16.msra.mxu0 0
      %740 = vmatprep.subr.bf16.mxu0 0
      %741 = vmatpush1.bf16.msra.mxu0 0
      %742 = vmatprep.subr.bf16.mxu0 0
      %743 = vmatpush1.bf16.msra.mxu0 0
      %744 = vmatprep.subr.bf16.mxu0 0
      %745 = vmatpush1.bf16.msra.mxu0 0
      %746 = vmatprep.subr.bf16.mxu0 0
      %747 = vmatpush1.bf16.msra.mxu0 0
      %748 = vmatprep.subr.bf16.mxu0 0
      %749 = vmatpush1.bf16.msra.mxu0 0
      %750 = vmatprep.subr.bf16.mxu0 0
      %751 = vmatpush1.bf16.msra.mxu0 0
      %752 = vmatprep.subr.bf16.mxu0 0
      %753 = vmatpush1.bf16.msra.mxu0 0
      %754 = vmatprep.subr.bf16.mxu0 0
      %755 = vmatpush1.bf16.msra.mxu0 0
      %756 = vmatprep.subr.bf16.mxu0 0
      %757 = vmatpush1.bf16.msra.mxu0 0
      %758 = vmatprep.subr.bf16.mxu0 0
      %759 = vmatpush1.bf16.msra.mxu0 0
      %760 = vmatprep.subr.bf16.mxu0 0
      %761 = vmatpush1.bf16.msra.mxu0 0
      %762 = vmatprep.subr.bf16.mxu0 0
      %763 = vmatpush1.bf16.msra.mxu0 0
      %764 = vmatprep.subr.bf16.mxu0 0
      %765 = vmatpush1.bf16.msra.mxu0 0
      %766 = vmatprep.mubr.bf16.mxu0 0
      %767 = vmatmul.mubr.bf16.gmra.mrb[0].mxu0 %v729
      %v768 = vpop.f32.mrb[0].mxu0
      %v769 = vadd.f32 0.0, %v768
      %v770 = vpop.f32.mrb[0].mxu0
      %v771 = vpop.f32.mrb[0].mxu0
      %v772 = vpop.f32.mrb[0].mxu0
      %773 = vdwg.mxu0
      %v775 = vsel %vm574, %v634, 0
      %v778 = vsel %vm638, %v380, 0
      %780 = vmatprep.subr.bf16.mxu0 0
      %781 = vmatpush1.bf16.msra.mxu0 %v778
      %782 = vmatprep.subr.bf16.mxu0 0
      %783 = vmatpush1.bf16.msra.mxu0 0
      %784 = vmatprep.subr.bf16.mxu0 0
      %785 = vmatpush1.bf16.msra.mxu0 0
      %786 = vmatprep.subr.bf16.mxu0 0
      %787 = vmatpush1.bf16.msra.mxu0 0
      %788 = vmatprep.subr.bf16.mxu0 0
      %789 = vmatpush1.bf16.msra.mxu0 0
      %790 = vmatprep.subr.bf16.mxu0 0
      %791 = vmatpush1.bf16.msra.mxu0 0
      %792 = vmatprep.subr.bf16.mxu0 0
      %793 = vmatpush1.bf16.msra.mxu0 0
      %794 = vmatprep.subr.bf16.mxu0 0
      %795 = vmatpush1.bf16.msra.mxu0 0
      %796 = vmatprep.subr.bf16.mxu0 0
      %797 = vmatpush1.bf16.msra.mxu0 0
      %798 = vmatprep.subr.bf16.mxu0 0
      %799 = vmatpush1.bf16.msra.mxu0 0
      %800 = vmatprep.subr.bf16.mxu0 0
      %801 = vmatpush1.bf16.msra.mxu0 0
      %802 = vmatprep.subr.bf16.mxu0 0
      %803 = vmatpush1.bf16.msra.mxu0 0
      %804 = vmatprep.subr.bf16.mxu0 0
      %805 = vmatpush1.bf16.msra.mxu0 0
      %806 = vmatprep.subr.bf16.mxu0 0
      %807 = vmatpush1.bf16.msra.mxu0 0
      %808 = vmatprep.subr.bf16.mxu0 0
      %809 = vmatpush1.bf16.msra.mxu0 0
      %810 = vmatprep.subr.bf16.mxu0 0
      %811 = vmatpush1.bf16.msra.mxu0 0
      %812 = vmatprep.mubr.bf16.mxu0 0
      %813 = vmatmul.mubr.bf16.gmra.mrb[0].mxu0 %v775
      %v814 = vpop.f32.mrb[0].mxu0
      %v815 = vadd.f32 0.0, %v814
      %v816 = vpop.f32.mrb[0].mxu0
      %v817 = vpop.f32.mrb[0].mxu0
      %v818 = vpop.f32.mrb[0].mxu0
      %819 = vdwg.mxu0
      %820 = vst.msk [vmem:[%s366] sm:$0xff] %vm389, %v677
      %821 = vst.msk [vmem:[%s366 + $0x8] sm:$0xff] %vm389, %v723
      %822 = vst.msk [vmem:[%s366 + $0x10] sm:$0xff] %vm389, %v769
      %823 = vst.msk [vmem:[%s366 + $0x18] sm:$0xff] %vm389, %v815
      %v826 = vunpack.c.l.s4 1966171168
      %v827 = vunpack.c.0.s8 %v826
      %v828 = vlaneseq
      %v829 = vshrl.u32 %v828, 7
      %v830 = vsub.s32 %v827, %v829
      %v831 = vrot.slane %v631, %v830
      %v832 = vcombine.high %v831, %v831
      %v834 = vunpack.c.l.s4 1966171168
      %v835 = vunpack.c.0.s8 %v834
      %v836 = vlaneseq
      %v837 = vshrl.u32 %v836, 7
      %v838 = vsub.s32 %v835, %v837
      %v839 = vrot.slane %v831, %v838
      %v841 = vunpack.c.l.s4 1966171168
      %v842 = vunpack.c.0.s8 %v841
      %v843 = vlaneseq
      %v844 = vshrl.u32 %v843, 7
      %v845 = vsub.s32 %v842, %v844
      %v846 = vrot.slane %v832, %v845
      %v847 = vcombine.high %v839, %v839
      %v848 = vcombine.high %v846, %v846
      %v849 = vunpack.i.l.s16 %v839
      %v850 = vunpack.i.h.s16 %v839
      %v851 = vunpack.i.l.s16 %v846
      %v852 = vunpack.i.h.s16 %v846
      %v853 = vunpack.i.l.s16 %v847
      %v854 = vunpack.i.h.s16 %v847
      %v855 = vunpack.i.l.s16 %v848
      %v856 = vunpack.i.h.s16 %v848
      %v857 = vpack.i.b16 %v849, %v849
      %v858 = vpack.i.b16 %v850, %v850
      %v859 = vpack.i.b16 %v851, %v851
      %v860 = vpack.i.b16 %v852, %v852
      %v861 = vpack.i.b16 %v853, %v853
      %v862 = vpack.i.b16 %v854, %v854
      %v863 = vpack.i.b16 %v855, %v855
      %v864 = vpack.i.b16 %v856, %v856
      %v866 = vunpack.c.l.s4 857870592
      %v867 = vunpack.c.0.s8 %v866
      %v868 = vlaneseq
      %v869 = vshrl.u32 %v868, 7
      %v870 = vsub.s32 %v867, %v869
      %v871 = vrot.slane %v857, %v870
      %v873 = vunpack.c.l.s4 857870592
      %v874 = vunpack.c.0.s8 %v873
      %v875 = vlaneseq
      %v876 = vshrl.u32 %v875, 7
      %v877 = vsub.s32 %v874, %v876
      %v878 = vrot.slane %v858, %v877
      %v880 = vunpack.c.l.s4 857870592
      %v881 = vunpack.c.0.s8 %v880
      %v882 = vlaneseq
      %v883 = vshrl.u32 %v882, 7
      %v884 = vsub.s32 %v881, %v883
      %v885 = vrot.slane %v859, %v884
      %v887 = vunpack.c.l.s4 857870592
      %v888 = vunpack.c.0.s8 %v887
      %v889 = vlaneseq
      %v890 = vshrl.u32 %v889, 7
      %v891 = vsub.s32 %v888, %v890
      %v892 = vrot.slane %v860, %v891
      %v894 = vunpack.c.l.s4 857870592
      %v895 = vunpack.c.0.s8 %v894
      %v896 = vlaneseq
      %v897 = vshrl.u32 %v896, 7
      %v898 = vsub.s32 %v895, %v897
      %v899 = vrot.slane %v861, %v898
      %v901 = vunpack.c.l.s4 857870592
      %v902 = vunpack.c.0.s8 %v901
      %v903 = vlaneseq
      %v904 = vshrl.u32 %v903, 7
      %v905 = vsub.s32 %v902, %v904
      %v906 = vrot.slane %v862, %v905
      %v908 = vunpack.c.l.s4 857870592
      %v909 = vunpack.c.0.s8 %v908
      %v910 = vlaneseq
      %v911 = vshrl.u32 %v910, 7
      %v912 = vsub.s32 %v909, %v911
      %v913 = vrot.slane %v863, %v912
      %v915 = vunpack.c.l.s4 857870592
      %v916 = vunpack.c.0.s8 %v915
      %v917 = vlaneseq
      %v918 = vshrl.u32 %v917, 7
      %v919 = vsub.s32 %v916, %v918
      %v920 = vrot.slane %v864, %v919
      %vm929 = vcmask 57344
      %vm930 = vsmask.f32 256
      %vm931 = vmand %vm929, %vm930
      %v932 = vld [vmem:[#allocation2] sm:$0x1]
      %v933 = vsel %vm931, %v871, %v932
      %934 = vst [vmem:[#allocation2] sm:$0x1] %v933
      %v935 = vld [vmem:[#allocation2 + $0x2] sm:$0x1]
      %v936 = vsel %vm931, %v878, %v935
      %937 = vst [vmem:[#allocation2 + $0x2] sm:$0x1] %v936
      %v938 = vld [vmem:[#allocation2 + $0x4] sm:$0x1]
      %v939 = vsel %vm931, %v885, %v938
      %940 = vst [vmem:[#allocation2 + $0x4] sm:$0x1] %v939
      %v941 = vld [vmem:[#allocation2 + $0x6] sm:$0x1]
      %v942 = vsel %vm931, %v892, %v941
      %943 = vst [vmem:[#allocation2 + $0x6] sm:$0x1] %v942
      %v944 = vld [vmem:[#allocation2 + $0x8] sm:$0x1]
      %v945 = vsel %vm931, %v899, %v944
      %946 = vst [vmem:[#allocation2 + $0x8] sm:$0x1] %v945
      %v947 = vld [vmem:[#allocation2 + $0xa] sm:$0x1]
      %v948 = vsel %vm931, %v906, %v947
      %949 = vst [vmem:[#allocation2 + $0xa] sm:$0x1] %v948
      %v950 = vld [vmem:[#allocation2 + $0xc] sm:$0x1]
      %v951 = vsel %vm931, %v913, %v950
      %952 = vst [vmem:[#allocation2 + $0xc] sm:$0x1] %v951
      %v953 = vld [vmem:[#allocation2 + $0xe] sm:$0x1]
      %v954 = vsel %vm931, %v920, %v953
      %955 = vst [vmem:[#allocation2 + $0xe] sm:$0x1] %v954
      %v958 = vunpack.c.l.s4 1966171168
      %v959 = vunpack.c.0.s8 %v958
      %v960 = vlaneseq
      %v961 = vshrl.u32 %v960, 7
      %v962 = vsub.s32 %v959, %v961
      %v963 = vrot.slane %v632, %v962
      %v964 = vcombine.high %v963, %v963
      %v966 = vunpack.c.l.s4 1966171168
      %v967 = vunpack.c.0.s8 %v966
      %v968 = vlaneseq
      %v969 = vshrl.u32 %v968, 7
      %v970 = vsub.s32 %v967, %v969
      %v971 = vrot.slane %v963, %v970
      %v973 = vunpack.c.l.s4 1966171168
      %v974 = vunpack.c.0.s8 %v973
      %v975 = vlaneseq
      %v976 = vshrl.u32 %v975, 7
      %v977 = vsub.s32 %v974, %v976
      %v978 = vrot.slane %v964, %v977
      %v979 = vcombine.high %v971, %v971
      %v980 = vcombine.high %v978, %v978
      %v981 = vunpack.i.l.s16 %v971
      %v982 = vunpack.i.h.s16 %v971
      %v983 = vunpack.i.l.s16 %v978
      %v984 = vunpack.i.h.s16 %v978
      %v985 = vunpack.i.l.s16 %v979
      %v986 = vunpack.i.h.s16 %v979
      %v987 = vunpack.i.l.s16 %v980
      %v988 = vunpack.i.h.s16 %v980
      %v989 = vpack.i.b16 %v981, %v981
      %v990 = vpack.i.b16 %v982, %v982
      %v991 = vpack.i.b16 %v983, %v983
      %v992 = vpack.i.b16 %v984, %v984
      %v993 = vpack.i.b16 %v985, %v985
      %v994 = vpack.i.b16 %v986, %v986
      %v995 = vpack.i.b16 %v987, %v987
      %v996 = vpack.i.b16 %v988, %v988
      %v998 = vunpack.c.l.s4 857870592
      %v999 = vunpack.c.0.s8 %v998
      %v1000 = vlaneseq
      %v1001 = vshrl.u32 %v1000, 7
      %v1002 = vsub.s32 %v999, %v1001
      %v1003 = vrot.slane %v989, %v1002
      %v1005 = vunpack.c.l.s4 857870592
      %v1006 = vunpack.c.0.s8 %v1005
      %v1007 = vlaneseq
      %v1008 = vshrl.u32 %v1007, 7
      %v1009 = vsub.s32 %v1006, %v1008
      %v1010 = vrot.slane %v990, %v1009
      %v1012 = vunpack.c.l.s4 857870592
      %v1013 = vunpack.c.0.s8 %v1012
      %v1014 = vlaneseq
      %v1015 = vshrl.u32 %v1014, 7
      %v1016 = vsub.s32 %v1013, %v1015
      %v1017 = vrot.slane %v991, %v1016
      %v1019 = vunpack.c.l.s4 857870592
      %v1020 = vunpack.c.0.s8 %v1019
      %v1021 = vlaneseq
      %v1022 = vshrl.u32 %v1021, 7
      %v1023 = vsub.s32 %v1020, %v1022
      %v1024 = vrot.slane %v992, %v1023
      %v1026 = vunpack.c.l.s4 857870592
      %v1027 = vunpack.c.0.s8 %v1026
      %v1028 = vlaneseq
      %v1029 = vshrl.u32 %v1028, 7
      %v1030 = vsub.s32 %v1027, %v1029
      %v1031 = vrot.slane %v993, %v1030
      %v1033 = vunpack.c.l.s4 857870592
      %v1034 = vunpack.c.0.s8 %v1033
      %v1035 = vlaneseq
      %v1036 = vshrl.u32 %v1035, 7
      %v1037 = vsub.s32 %v1034, %v1036
      %v1038 = vrot.slane %v994, %v1037
      %v1040 = vunpack.c.l.s4 857870592
      %v1041 = vunpack.c.0.s8 %v1040
      %v1042 = vlaneseq
      %v1043 = vshrl.u32 %v1042, 7
      %v1044 = vsub.s32 %v1041, %v1043
      %v1045 = vrot.slane %v995, %v1044
      %v1047 = vunpack.c.l.s4 857870592
      %v1048 = vunpack.c.0.s8 %v1047
      %v1049 = vlaneseq
      %v1050 = vshrl.u32 %v1049, 7
      %v1051 = vsub.s32 %v1048, %v1050
      %v1052 = vrot.slane %v996, %v1051
      %vm1061 = vsmask.f32 7938
      %vm1062 = vmand %vm929, %vm1061
      %v1063 = vld [vmem:[#allocation2] sm:$0x1]
      %v1064 = vsel %vm1062, %v1003, %v1063
      %1065 = vst [vmem:[#allocation2] sm:$0x1] %v1064
      %v1066 = vld [vmem:[#allocation2 + $0x2] sm:$0x1]
      %v1067 = vsel %vm1062, %v1010, %v1066
      %1068 = vst [vmem:[#allocation2 + $0x2] sm:$0x1] %v1067
      %v1069 = vld [vmem:[#allocation2 + $0x4] sm:$0x1]
      %v1070 = vsel %vm1062, %v1017, %v1069
      %1071 = vst [vmem:[#allocation2 + $0x4] sm:$0x1] %v1070
      %v1072 = vld [vmem:[#allocation2 + $0x6] sm:$0x1]
      %v1073 = vsel %vm1062, %v1024, %v1072
      %1074 = vst [vmem:[#allocation2 + $0x6] sm:$0x1] %v1073
      %v1075 = vld [vmem:[#allocation2 + $0x8] sm:$0x1]
      %v1076 = vsel %vm1062, %v1031, %v1075
      %1077 = vst [vmem:[#allocation2 + $0x8] sm:$0x1] %v1076
      %v1078 = vld [vmem:[#allocation2 + $0xa] sm:$0x1]
      %v1079 = vsel %vm1062, %v1038, %v1078
      %1080 = vst [vmem:[#allocation2 + $0xa] sm:$0x1] %v1079
      %v1081 = vld [vmem:[#allocation2 + $0xc] sm:$0x1]
      %v1082 = vsel %vm1062, %v1045, %v1081
      %1083 = vst [vmem:[#allocation2 + $0xc] sm:$0x1] %v1082
      %v1084 = vld [vmem:[#allocation2 + $0xe] sm:$0x1]
      %v1085 = vsel %vm1062, %v1052, %v1084
      %1086 = vst [vmem:[#allocation2 + $0xe] sm:$0x1] %v1085
      %v1089 = vunpack.c.l.s4 1966171168
      %v1090 = vunpack.c.0.s8 %v1089
      %v1091 = vlaneseq
      %v1092 = vshrl.u32 %v1091, 7
      %v1093 = vsub.s32 %v1090, %v1092
      %v1094 = vrot.slane %v633, %v1093
      %v1095 = vcombine.high %v1094, %v1094
      %v1097 = vunpack.c.l.s4 1966171168
      %v1098 = vunpack.c.0.s8 %v1097
      %v1099 = vlaneseq
      %v1100 = vshrl.u32 %v1099, 7
      %v1101 = vsub.s32 %v1098, %v1100
      %v1102 = vrot.slane %v1094, %v1101
      %v1104 = vunpack.c.l.s4 1966171168
      %v1105 = vunpack.c.0.s8 %v1104
      %v1106 = vlaneseq
      %v1107 = vshrl.u32 %v1106, 7
      %v1108 = vsub.s32 %v1105, %v1107
      %v1109 = vrot.slane %v1095, %v1108
      %v1110 = vcombine.high %v1102, %v1102
      %v1111 = vcombine.high %v1109, %v1109
      %v1112 = vunpack.i.l.s16 %v1102
      %v1113 = vunpack.i.h.s16 %v1102
      %v1114 = vunpack.i.l.s16 %v1109
      %v1115 = vunpack.i.h.s16 %v1109
      %v1116 = vunpack.i.l.s16 %v1110
      %v1117 = vunpack.i.h.s16 %v1110
      %v1118 = vunpack.i.l.s16 %v1111
      %v1119 = vunpack.i.h.s16 %v1111
      %v1120 = vpack.i.b16 %v1112, %v1112
      %v1121 = vpack.i.b16 %v1113, %v1113
      %v1122 = vpack.i.b16 %v1114, %v1114
      %v1123 = vpack.i.b16 %v1115, %v1115
      %v1124 = vpack.i.b16 %v1116, %v1116
      %v1125 = vpack.i.b16 %v1117, %v1117
      %v1126 = vpack.i.b16 %v1118, %v1118
      %v1127 = vpack.i.b16 %v1119, %v1119
      %v1129 = vunpack.c.l.s4 857870592
      %v1130 = vunpack.c.0.s8 %v1129
      %v1131 = vlaneseq
      %v1132 = vshrl.u32 %v1131, 7
      %v1133 = vsub.s32 %v1130, %v1132
      %v1134 = vrot.slane %v1120, %v1133
      %v1136 = vunpack.c.l.s4 857870592
      %v1137 = vunpack.c.0.s8 %v1136
      %v1138 = vlaneseq
      %v1139 = vshrl.u32 %v1138, 7
      %v1140 = vsub.s32 %v1137, %v1139
      %v1141 = vrot.slane %v1121, %v1140
      %v1143 = vunpack.c.l.s4 857870592
      %v1144 = vunpack.c.0.s8 %v1143
      %v1145 = vlaneseq
      %v1146 = vshrl.u32 %v1145, 7
      %v1147 = vsub.s32 %v1144, %v1146
      %v1148 = vrot.slane %v1122, %v1147
      %v1150 = vunpack.c.l.s4 857870592
      %v1151 = vunpack.c.0.s8 %v1150
      %v1152 = vlaneseq
      %v1153 = vshrl.u32 %v1152, 7
      %v1154 = vsub.s32 %v1151, %v1153
      %v1155 = vrot.slane %v1123, %v1154
      %v1157 = vunpack.c.l.s4 857870592
      %v1158 = vunpack.c.0.s8 %v1157
      %v1159 = vlaneseq
      %v1160 = vshrl.u32 %v1159, 7
      %v1161 = vsub.s32 %v1158, %v1160
      %v1162 = vrot.slane %v1124, %v1161
      %v1164 = vunpack.c.l.s4 857870592
      %v1165 = vunpack.c.0.s8 %v1164
      %v1166 = vlaneseq
      %v1167 = vshrl.u32 %v1166, 7
      %v1168 = vsub.s32 %v1165, %v1167
      %v1169 = vrot.slane %v1125, %v1168
      %v1171 = vunpack.c.l.s4 857870592
      %v1172 = vunpack.c.0.s8 %v1171
      %v1173 = vlaneseq
      %v1174 = vshrl.u32 %v1173, 7
      %v1175 = vsub.s32 %v1172, %v1174
      %v1176 = vrot.slane %v1126, %v1175
      %v1178 = vunpack.c.l.s4 857870592
      %v1179 = vunpack.c.0.s8 %v1178
      %v1180 = vlaneseq
      %v1181 = vshrl.u32 %v1180, 7
      %v1182 = vsub.s32 %v1179, %v1181
      %v1183 = vrot.slane %v1127, %v1182
      %vm1192 = vcmask 58369
      %vm1193 = vsmask.f32 1280
      %vm1194 = vmand %vm1192, %vm1193
      %v1195 = vld [vmem:[#allocation2] sm:$0x2]
      %v1196 = vsel %vm1194, %v1134, %v1195
      %1197 = vst [vmem:[#allocation2] sm:$0x2] %v1196
      %v1198 = vld [vmem:[#allocation2 + $0x2] sm:$0x2]
      %v1199 = vsel %vm1194, %v1141, %v1198
      %1200 = vst [vmem:[#allocation2 + $0x2] sm:$0x2] %v1199
      %v1201 = vld [vmem:[#allocation2 + $0x4] sm:$0x2]
      %v1202 = vsel %vm1194, %v1148, %v1201
      %1203 = vst [vmem:[#allocation2 + $0x4] sm:$0x2] %v1202
      %v1204 = vld [vmem:[#allocation2 + $0x6] sm:$0x2]
      %v1205 = vsel %vm1194, %v1155, %v1204
      %1206 = vst [vmem:[#allocation2 + $0x6] sm:$0x2] %v1205
      %v1207 = vld [vmem:[#allocation2 + $0x8] sm:$0x2]
      %v1208 = vsel %vm1194, %v1162, %v1207
      %1209 = vst [vmem:[#allocation2 + $0x8] sm:$0x2] %v1208
      %v1210 = vld [vmem:[#allocation2 + $0xa] sm:$0x2]
      %v1211 = vsel %vm1194, %v1169, %v1210
      %1212 = vst [vmem:[#allocation2 + $0xa] sm:$0x2] %v1211
      %v1213 = vld [vmem:[#allocation2 + $0xc] sm:$0x2]
      %v1214 = vsel %vm1194, %v1176, %v1213
      %1215 = vst [vmem:[#allocation2 + $0xc] sm:$0x2] %v1214
      %v1216 = vld [vmem:[#allocation2 + $0xe] sm:$0x2]
      %v1217 = vsel %vm1194, %v1183, %v1216
      %1218 = vst [vmem:[#allocation2 + $0xe] sm:$0x2] %v1217
      %v1221 = vunpack.c.l.s4 1966171168
      %v1222 = vunpack.c.0.s8 %v1221
      %v1223 = vlaneseq
      %v1224 = vshrl.u32 %v1223, 7
      %v1225 = vsub.s32 %v1222, %v1224
      %v1226 = vrot.slane %v634, %v1225
      %v1227 = vcombine.high %v1226, %v1226
      %v1229 = vunpack.c.l.s4 1966171168
      %v1230 = vunpack.c.0.s8 %v1229
      %v1231 = vlaneseq
      %v1232 = vshrl.u32 %v1231, 7
      %v1233 = vsub.s32 %v1230, %v1232
      %v1234 = vrot.slane %v1226, %v1233
      %v1236 = vunpack.c.l.s4 1966171168
      %v1237 = vunpack.c.0.s8 %v1236
      %v1238 = vlaneseq
      %v1239 = vshrl.u32 %v1238, 7
      %v1240 = vsub.s32 %v1237, %v1239
      %v1241 = vrot.slane %v1227, %v1240
      %v1242 = vcombine.high %v1234, %v1234
      %v1243 = vcombine.high %v1241, %v1241
      %v1244 = vunpack.i.l.s16 %v1234
      %v1245 = vunpack.i.h.s16 %v1234
      %v1246 = vunpack.i.l.s16 %v1241
      %v1247 = vunpack.i.h.s16 %v1241
      %v1248 = vunpack.i.l.s16 %v1242
      %v1249 = vunpack.i.h.s16 %v1242
      %v1250 = vunpack.i.l.s16 %v1243
      %v1251 = vunpack.i.h.s16 %v1243
      %v1252 = vpack.i.b16 %v1244, %v1244
      %v1253 = vpack.i.b16 %v1245, %v1245
      %v1254 = vpack.i.b16 %v1246, %v1246
      %v1255 = vpack.i.b16 %v1247, %v1247
      %v1256 = vpack.i.b16 %v1248, %v1248
      %v1257 = vpack.i.b16 %v1249, %v1249
      %v1258 = vpack.i.b16 %v1250, %v1250
      %v1259 = vpack.i.b16 %v1251, %v1251
      %v1261 = vunpack.c.l.s4 857870592
      %v1262 = vunpack.c.0.s8 %v1261
      %v1263 = vlaneseq
      %v1264 = vshrl.u32 %v1263, 7
      %v1265 = vsub.s32 %v1262, %v1264
      %v1266 = vrot.slane %v1252, %v1265
      %v1268 = vunpack.c.l.s4 857870592
      %v1269 = vunpack.c.0.s8 %v1268
      %v1270 = vlaneseq
      %v1271 = vshrl.u32 %v1270, 7
      %v1272 = vsub.s32 %v1269, %v1271
      %v1273 = vrot.slane %v1253, %v1272
      %v1275 = vunpack.c.l.s4 857870592
      %v1276 = vunpack.c.0.s8 %v1275
      %v1277 = vlaneseq
      %v1278 = vshrl.u32 %v1277, 7
      %v1279 = vsub.s32 %v1276, %v1278
      %v1280 = vrot.slane %v1254, %v1279
      %v1282 = vunpack.c.l.s4 857870592
      %v1283 = vunpack.c.0.s8 %v1282
      %v1284 = vlaneseq
      %v1285 = vshrl.u32 %v1284, 7
      %v1286 = vsub.s32 %v1283, %v1285
      %v1287 = vrot.slane %v1255, %v1286
      %v1289 = vunpack.c.l.s4 857870592
      %v1290 = vunpack.c.0.s8 %v1289
      %v1291 = vlaneseq
      %v1292 = vshrl.u32 %v1291, 7
      %v1293 = vsub.s32 %v1290, %v1292
      %v1294 = vrot.slane %v1256, %v1293
      %v1296 = vunpack.c.l.s4 857870592
      %v1297 = vunpack.c.0.s8 %v1296
      %v1298 = vlaneseq
      %v1299 = vshrl.u32 %v1298, 7
      %v1300 = vsub.s32 %v1297, %v1299
      %v1301 = vrot.slane %v1257, %v1300
      %v1303 = vunpack.c.l.s4 857870592
      %v1304 = vunpack.c.0.s8 %v1303
      %v1305 = vlaneseq
      %v1306 = vshrl.u32 %v1305, 7
      %v1307 = vsub.s32 %v1304, %v1306
      %v1308 = vrot.slane %v1258, %v1307
      %v1310 = vunpack.c.l.s4 857870592
      %v1311 = vunpack.c.0.s8 %v1310
      %v1312 = vlaneseq
      %v1313 = vshrl.u32 %v1312, 7
      %v1314 = vsub.s32 %v1311, %v1313
      %v1315 = vrot.slane %v1259, %v1314
      %vm1324 = vsmask.f32 7942
      %vm1325 = vmand %vm1192, %vm1324
      %v1326 = vld [vmem:[#allocation2] sm:$0x2]
      %v1327 = vsel %vm1325, %v1266, %v1326
      %1328 = vst [vmem:[#allocation2] sm:$0x2] %v1327
      %v1329 = vld [vmem:[#allocation2 + $0x2] sm:$0x2]
      %v1330 = vsel %vm1325, %v1273, %v1329
      %1331 = vst [vmem:[#allocation2 + $0x2] sm:$0x2] %v1330
      %v1332 = vld [vmem:[#allocation2 + $0x4] sm:$0x2]
      %v1333 = vsel %vm1325, %v1280, %v1332
      %1334 = vst [vmem:[#allocation2 + $0x4] sm:$0x2] %v1333
      %v1335 = vld [vmem:[#allocation2 + $0x6] sm:$0x2]
      %v1336 = vsel %vm1325, %v1287, %v1335
      %1337 = vst [vmem:[#allocation2 + $0x6] sm:$0x2] %v1336
      %v1338 = vld [vmem:[#allocation2 + $0x8] sm:$0x2]
      %v1339 = vsel %vm1325, %v1294, %v1338
      %1340 = vst [vmem:[#allocation2 + $0x8] sm:$0x2] %v1339
      %v1341 = vld [vmem:[#allocation2 + $0xa] sm:$0x2]
      %v1342 = vsel %vm1325, %v1301, %v1341
      %1343 = vst [vmem:[#allocation2 + $0xa] sm:$0x2] %v1342
      %v1344 = vld [vmem:[#allocation2 + $0xc] sm:$0x2]
      %v1345 = vsel %vm1325, %v1308, %v1344
      %1346 = vst [vmem:[#allocation2 + $0xc] sm:$0x2] %v1345
      %v1347 = vld [vmem:[#allocation2 + $0xe] sm:$0x2]
      %v1348 = vsel %vm1325, %v1315, %v1347
      %1349 = vst [vmem:[#allocation2 + $0xe] sm:$0x2] %v1348
      %v1350 = vld [vmem:[#allocation2] sm:$0x3]
      %v1351 = vld [vmem:[#allocation2 + $0x2] sm:$0x3]
      %v1352 = vld [vmem:[#allocation2 + $0x4] sm:$0x3]
      %v1353 = vld [vmem:[#allocation2 + $0x6] sm:$0x3]
      %v1354 = vld [vmem:[#allocation2 + $0x8] sm:$0x3]
      %v1355 = vld [vmem:[#allocation2 + $0xa] sm:$0x3]
      %v1356 = vld [vmem:[#allocation2 + $0xc] sm:$0x3]
      %v1357 = vld [vmem:[#allocation2 + $0xe] sm:$0x3]
      %v1358 = vld [vmem:[%s339] sm:$0xf]
      %v1359 = vld [vmem:[%s339 + $0x4] sm:$0xf]
      %v1360 = vld [vmem:[%s339 + $0x8] sm:$0xf]
      %v1361 = vld [vmem:[%s339 + $0xc] sm:$0xf]
      %v1362 = vld [vmem:[%s339 + $0x10] sm:$0xf]
      %v1363 = vld [vmem:[%s339 + $0x14] sm:$0xf]
      %v1364 = vld [vmem:[%s339 + $0x18] sm:$0xf]
      %v1365 = vld [vmem:[%s339 + $0x1c] sm:$0xf]
      %v1367 = vsel %vm574, %v1350, 0
      %v1370 = vsel %vm638, %v1358, 0
      %1372 = vmatprep.subr.bf16.mxu0 0
      %1373 = vmatpush1.bf16.msra.mxu0 %v1370
      %1374 = vmatprep.subr.bf16.mxu0 0
      %1375 = vmatpush1.bf16.msra.mxu0 0
      %1376 = vmatprep.subr.bf16.mxu0 0
      %1377 = vmatpush1.bf16.msra.mxu0 0
      %1378 = vmatprep.subr.bf16.mxu0 0
      %1379 = vmatpush1.bf16.msra.mxu0 0
      %1380 = vmatprep.subr.bf16.mxu0 0
      %1381 = vmatpush1.bf16.msra.mxu0 0
      %1382 = vmatprep.subr.bf16.mxu0 0
      %1383 = vmatpush1.bf16.msra.mxu0 0
      %1384 = vmatprep.subr.bf16.mxu0 0
      %1385 = vmatpush1.bf16.msra.mxu0 0
      %1386 = vmatprep.subr.bf16.mxu0 0
      %1387 = vmatpush1.bf16.msra.mxu0 0
      %1388 = vmatprep.subr.bf16.mxu0 0
      %1389 = vmatpush1.bf16.msra.mxu0 0
      %1390 = vmatprep.subr.bf16.mxu0 0
      %1391 = vmatpush1.bf16.msra.mxu0 0
      %1392 = vmatprep.subr.bf16.mxu0 0
      %1393 = vmatpush1.bf16.msra.mxu0 0
      %1394 = vmatprep.subr.bf16.mxu0 0
      %1395 = vmatpush1.bf16.msra.mxu0 0
      %1396 = vmatprep.subr.bf16.mxu0 0
      %1397 = vmatpush1.bf16.msra.mxu0 0
      %1398 = vmatprep.subr.bf16.mxu0 0
      %1399 = vmatpush1.bf16.msra.mxu0 0
      %1400 = vmatprep.subr.bf16.mxu0 0
      %1401 = vmatpush1.bf16.msra.mxu0 0
      %1402 = vmatprep.subr.bf16.mxu0 0
      %1403 = vmatpush1.bf16.msra.mxu0 0
      %1404 = vmatprep.mubr.bf16.mxu0 0
      %1405 = vmatmul.mubr.bf16.gmra.mrb[0].mxu0 %v1367
      %v1406 = vpop.f32.mrb[0].mxu0
      %v1407 = vadd.f32 0.0, %v1406
      %v1408 = vpop.f32.mrb[0].mxu0
      %v1409 = vpop.f32.mrb[0].mxu0
      %v1410 = vpop.f32.mrb[0].mxu0
      %1411 = vdwg.mxu0
      %v1413 = vsel %vm574, %v1351, 0
      %v1416 = vsel %vm638, %v1359, 0
      %1418 = vmatprep.subr.bf16.mxu0 0
      %1419 = vmatpush1.bf16.msra.mxu0 %v1416
      %1420 = vmatprep.subr.bf16.mxu0 0
      %1421 = vmatpush1.bf16.msra.mxu0 0
      %1422 = vmatprep.subr.bf16.mxu0 0
      %1423 = vmatpush1.bf16.msra.mxu0 0
      %1424 = vmatprep.subr.bf16.mxu0 0
      %1425 = vmatpush1.bf16.msra.mxu0 0
      %1426 = vmatprep.subr.bf16.mxu0 0
      %1427 = vmatpush1.bf16.msra.mxu0 0
      %1428 = vmatprep.subr.bf16.mxu0 0
      %1429 = vmatpush1.bf16.msra.mxu0 0
      %1430 = vmatprep.subr.bf16.mxu0 0
      %1431 = vmatpush1.bf16.msra.mxu0 0
      %1432 = vmatprep.subr.bf16.mxu0 0
      %1433 = vmatpush1.bf16.msra.mxu0 0
      %1434 = vmatprep.subr.bf16.mxu0 0
      %1435 = vmatpush1.bf16.msra.mxu0 0
      %1436 = vmatprep.subr.bf16.mxu0 0
      %1437 = vmatpush1.bf16.msra.mxu0 0
      %1438 = vmatprep.subr.bf16.mxu0 0
      %1439 = vmatpush1.bf16.msra.mxu0 0
      %1440 = vmatprep.subr.bf16.mxu0 0
      %1441 = vmatpush1.bf16.msra.mxu0 0
      %1442 = vmatprep.subr.bf16.mxu0 0
      %1443 = vmatpush1.bf16.msra.mxu0 0
      %1444 = vmatprep.subr.bf16.mxu0 0
      %1445 = vmatpush1.bf16.msra.mxu0 0
      %1446 = vmatprep.subr.bf16.mxu0 0
      %1447 = vmatpush1.bf16.msra.mxu0 0
      %1448 = vmatprep.subr.bf16.mxu0 0
      %1449 = vmatpush1.bf16.msra.mxu0 0
      %1450 = vmatprep.mubr.bf16.mxu0 0
      %1451 = vmatmul.mubr.bf16.gmra.mrb[0].mxu0 %v1413
      %v1452 = vpop.f32.mrb[0].mxu0
      %v1453 = vadd.f32 0.0, %v1452
      %v1454 = vpop.f32.mrb[0].mxu0
      %v1455 = vpop.f32.mrb[0].mxu0
      %v1456 = vpop.f32.mrb[0].mxu0
      %1457 = vdwg.mxu0
      %v1459 = vsel %vm574, %v1352, 0
      %v1462 = vsel %vm638, %v1360, 0
      %1464 = vmatprep.subr.bf16.mxu0 0
      %1465 = vmatpush1.bf16.msra.mxu0 %v1462
      %1466 = vmatprep.subr.bf16.mxu0 0
      %1467 = vmatpush1.bf16.msra.mxu0 0
      %1468 = vmatprep.subr.bf16.mxu0 0
      %1469 = vmatpush1.bf16.msra.mxu0 0
      %1470 = vmatprep.subr.bf16.mxu0 0
      %1471 = vmatpush1.bf16.msra.mxu0 0
      %1472 = vmatprep.subr.bf16.mxu0 0
      %1473 = vmatpush1.bf16.msra.mxu0 0
      %1474 = vmatprep.subr.bf16.mxu0 0
      %1475 = vmatpush1.bf16.msra.mxu0 0
      %1476 = vmatprep.subr.bf16.mxu0 0
      %1477 = vmatpush1.bf16.msra.mxu0 0
      %1478 = vmatprep.subr.bf16.mxu0 0
      %1479 = vmatpush1.bf16.msra.mxu0 0
      %1480 = vmatprep.subr.bf16.mxu0 0
      %1481 = vmatpush1.bf16.msra.mxu0 0
      %1482 = vmatprep.subr.bf16.mxu0 0
      %1483 = vmatpush1.bf16.msra.mxu0 0
      %1484 = vmatprep.subr.bf16.mxu0 0
      %1485 = vmatpush1.bf16.msra.mxu0 0
      %1486 = vmatprep.subr.bf16.mxu0 0
      %1487 = vmatpush1.bf16.msra.mxu0 0
      %1488 = vmatprep.subr.bf16.mxu0 0
      %1489 = vmatpush1.bf16.msra.mxu0 0
      %1490 = vmatprep.subr.bf16.mxu0 0
      %1491 = vmatpush1.bf16.msra.mxu0 0
      %1492 = vmatprep.subr.bf16.mxu0 0
      %1493 = vmatpush1.bf16.msra.mxu0 0
      %1494 = vmatprep.subr.bf16.mxu0 0
      %1495 = vmatpush1.bf16.msra.mxu0 0
      %1496 = vmatprep.mubr.bf16.mxu0 0
      %1497 = vmatmul.mubr.bf16.gmra.mrb[0].mxu0 %v1459
      %v1498 = vpop.f32.mrb[0].mxu0
      %v1499 = vadd.f32 0.0, %v1498
      %v1500 = vpop.f32.mrb[0].mxu0
      %v1501 = vpop.f32.mrb[0].mxu0
      %v1502 = vpop.f32.mrb[0].mxu0
      %1503 = vdwg.mxu0
      %v1505 = vsel %vm574, %v1353, 0
      %v1508 = vsel %vm638, %v1361, 0
      %1510 = vmatprep.subr.bf16.mxu0 0
      %1511 = vmatpush1.bf16.msra.mxu0 %v1508
      %1512 = vmatprep.subr.bf16.mxu0 0
      %1513 = vmatpush1.bf16.msra.mxu0 0
      %1514 = vmatprep.subr.bf16.mxu0 0
      %1515 = vmatpush1.bf16.msra.mxu0 0
      %1516 = vmatprep.subr.bf16.mxu0 0
      %1517 = vmatpush1.bf16.msra.mxu0 0
      %1518 = vmatprep.subr.bf16.mxu0 0
      %1519 = vmatpush1.bf16.msra.mxu0 0
      %1520 = vmatprep.subr.bf16.mxu0 0
      %1521 = vmatpush1.bf16.msra.mxu0 0
      %1522 = vmatprep.subr.bf16.mxu0 0
      %1523 = vmatpush1.bf16.msra.mxu0 0
      %1524 = vmatprep.subr.bf16.mxu0 0
      %1525 = vmatpush1.bf16.msra.mxu0 0
      %1526 = vmatprep.subr.bf16.mxu0 0
      %1527 = vmatpush1.bf16.msra.mxu0 0
      %1528 = vmatprep.subr.bf16.mxu0 0
      %1529 = vmatpush1.bf16.msra.mxu0 0
      %1530 = vmatprep.subr.bf16.mxu0 0
      %1531 = vmatpush1.bf16.msra.mxu0 0
      %1532 = vmatprep.subr.bf16.mxu0 0
      %1533 = vmatpush1.bf16.msra.mxu0 0
      %1534 = vmatprep.subr.bf16.mxu0 0
      %1535 = vmatpush1.bf16.msra.mxu0 0
      %1536 = vmatprep.subr.bf16.mxu0 0
      %1537 = vmatpush1.bf16.msra.mxu0 0
      %1538 = vmatprep.subr.bf16.mxu0 0
      %1539 = vmatpush1.bf16.msra.mxu0 0
      %1540 = vmatprep.subr.bf16.mxu0 0
      %1541 = vmatpush1.bf16.msra.mxu0 0
      %1542 = vmatprep.mubr.bf16.mxu0 0
      %1543 = vmatmul.mubr.bf16.gmra.mrb[0].mxu0 %v1505
      %v1544 = vpop.f32.mrb[0].mxu0
      %v1545 = vadd.f32 0.0, %v1544
      %v1546 = vpop.f32.mrb[0].mxu0
      %v1547 = vpop.f32.mrb[0].mxu0
      %v1548 = vpop.f32.mrb[0].mxu0
      %1549 = vdwg.mxu0
      %v1551 = vsel %vm574, %v1354, 0
      %v1554 = vsel %vm638, %v1362, 0
      %1556 = vmatprep.subr.bf16.mxu0 0
      %1557 = vmatpush1.bf16.msra.mxu0 %v1554
      %1558 = vmatprep.subr.bf16.mxu0 0
      %1559 = vmatpush1.bf16.msra.mxu0 0
      %1560 = vmatprep.subr.bf16.mxu0 0
      %1561 = vmatpush1.bf16.msra.mxu0 0
      %1562 = vmatprep.subr.bf16.mxu0 0
      %1563 = vmatpush1.bf16.msra.mxu0 0
      %1564 = vmatprep.subr.bf16.mxu0 0
      %1565 = vmatpush1.bf16.msra.mxu0 0
      %1566 = vmatprep.subr.bf16.mxu0 0
      %1567 = vmatpush1.bf16.msra.mxu0 0
      %1568 = vmatprep.subr.bf16.mxu0 0
      %1569 = vmatpush1.bf16.msra.mxu0 0
      %1570 = vmatprep.subr.bf16.mxu0 0
      %1571 = vmatpush1.bf16.msra.mxu0 0
      %1572 = vmatprep.subr.bf16.mxu0 0
      %1573 = vmatpush1.bf16.msra.mxu0 0
      %1574 = vmatprep.subr.bf16.mxu0 0
      %1575 = vmatpush1.bf16.msra.mxu0 0
      %1576 = vmatprep.subr.bf16.mxu0 0
      %1577 = vmatpush1.bf16.msra.mxu0 0
      %1578 = vmatprep.subr.bf16.mxu0 0
      %1579 = vmatpush1.bf16.msra.mxu0 0
      %1580 = vmatprep.subr.bf16.mxu0 0
      %1581 = vmatpush1.bf16.msra.mxu0 0
      %1582 = vmatprep.subr.bf16.mxu0 0
      %1583 = vmatpush1.bf16.msra.mxu0 0
      %1584 = vmatprep.subr.bf16.mxu0 0
      %1585 = vmatpush1.bf16.msra.mxu0 0
      %1586 = vmatprep.subr.bf16.mxu0 0
      %1587 = vmatpush1.bf16.msra.mxu0 0
      %1588 = vmatprep.mubr.bf16.mxu0 0
      %1589 = vmatmul.mubr.bf16.gmra.mrb[0].mxu0 %v1551
      %v1590 = vpop.f32.mrb[0].mxu0
      %v1591 = vadd.f32 0.0, %v1590
      %v1592 = vpop.f32.mrb[0].mxu0
      %v1593 = vpop.f32.mrb[0].mxu0
      %v1594 = vpop.f32.mrb[0].mxu0
      %1595 = vdwg.mxu0
      %v1597 = vsel %vm574, %v1355, 0
      %v1600 = vsel %vm638, %v1363, 0
      %1602 = vmatprep.subr.bf16.mxu0 0
      %1603 = vmatpush1.bf16.msra.mxu0 %v1600
      %1604 = vmatprep.subr.bf16.mxu0 0
      %1605 = vmatpush1.bf16.msra.mxu0 0
      %1606 = vmatprep.subr.bf16.mxu0 0
      %1607 = vmatpush1.bf16.msra.mxu0 0
      %1608 = vmatprep.subr.bf16.mxu0 0
      %1609 = vmatpush1.bf16.msra.mxu0 0
      %1610 = vmatprep.subr.bf16.mxu0 0
      %1611 = vmatpush1.bf16.msra.mxu0 0
      %1612 = vmatprep.subr.bf16.mxu0 0
      %1613 = vmatpush1.bf16.msra.mxu0 0
      %1614 = vmatprep.subr.bf16.mxu0 0
      %1615 = vmatpush1.bf16.msra.mxu0 0
      %1616 = vmatprep.subr.bf16.mxu0 0
      %1617 = vmatpush1.bf16.msra.mxu0 0
      %1618 = vmatprep.subr.bf16.mxu0 0
      %1619 = vmatpush1.bf16.msra.mxu0 0
      %1620 = vmatprep.subr.bf16.mxu0 0
      %1621 = vmatpush1.bf16.msra.mxu0 0
      %1622 = vmatprep.subr.bf16.mxu0 0
      %1623 = vmatpush1.bf16.msra.mxu0 0
      %1624 = vmatprep.subr.bf16.mxu0 0
      %1625 = vmatpush1.bf16.msra.mxu0 0
      %1626 = vmatprep.subr.bf16.mxu0 0
      %1627 = vmatpush1.bf16.msra.mxu0 0
      %1628 = vmatprep.subr.bf16.mxu0 0
      %1629 = vmatpush1.bf16.msra.mxu0 0
      %1630 = vmatprep.subr.bf16.mxu0 0
      %1631 = vmatpush1.bf16.msra.mxu0 0
      %1632 = vmatprep.subr.bf16.mxu0 0
      %1633 = vmatpush1.bf16.msra.mxu0 0
      %1634 = vmatprep.mubr.bf16.mxu0 0
      %1635 = vmatmul.mubr.bf16.gmra.mrb[0].mxu0 %v1597
      %v1636 = vpop.f32.mrb[0].mxu0
      %v1637 = vadd.f32 0.0, %v1636
      %v1638 = vpop.f32.mrb[0].mxu0
      %v1639 = vpop.f32.mrb[0].mxu0
      %v1640 = vpop.f32.mrb[0].mxu0
      %1641 = vdwg.mxu0
      %v1643 = vsel %vm574, %v1356, 0
      %v1646 = vsel %vm638, %v1364, 0
      %1648 = vmatprep.subr.bf16.mxu0 0
      %1649 = vmatpush1.bf16.msra.mxu0 %v1646
      %1650 = vmatprep.subr.bf16.mxu0 0
      %1651 = vmatpush1.bf16.msra.mxu0 0
      %1652 = vmatprep.subr.bf16.mxu0 0
      %1653 = vmatpush1.bf16.msra.mxu0 0
      %1654 = vmatprep.subr.bf16.mxu0 0
      %1655 = vmatpush1.bf16.msra.mxu0 0
      %1656 = vmatprep.subr.bf16.mxu0 0
      %1657 = vmatpush1.bf16.msra.mxu0 0
      %1658 = vmatprep.subr.bf16.mxu0 0
      %1659 = vmatpush1.bf16.msra.mxu0 0
      %1660 = vmatprep.subr.bf16.mxu0 0
      %1661 = vmatpush1.bf16.msra.mxu0 0
      %1662 = vmatprep.subr.bf16.mxu0 0
      %1663 = vmatpush1.bf16.msra.mxu0 0
      %1664 = vmatprep.subr.bf16.mxu0 0
      %1665 = vmatpush1.bf16.msra.mxu0 0
      %1666 = vmatprep.subr.bf16.mxu0 0
      %1667 = vmatpush1.bf16.msra.mxu0 0
      %1668 = vmatprep.subr.bf16.mxu0 0
      %1669 = vmatpush1.bf16.msra.mxu0 0
      %1670 = vmatprep.subr.bf16.mxu0 0
      %1671 = vmatpush1.bf16.msra.mxu0 0
      %1672 = vmatprep.subr.bf16.mxu0 0
      %1673 = vmatpush1.bf16.msra.mxu0 0
      %1674 = vmatprep.subr.bf16.mxu0 0
      %1675 = vmatpush1.bf16.msra.mxu0 0
      %1676 = vmatprep.subr.bf16.mxu0 0
      %1677 = vmatpush1.bf16.msra.mxu0 0
      %1678 = vmatprep.subr.bf16.mxu0 0
      %1679 = vmatpush1.bf16.msra.mxu0 0
      %1680 = vmatprep.mubr.bf16.mxu0 0
      %1681 = vmatmul.mubr.bf16.gmra.mrb[0].mxu0 %v1643
      %v1682 = vpop.f32.mrb[0].mxu0
      %v1683 = vadd.f32 0.0, %v1682
      %v1684 = vpop.f32.mrb[0].mxu0
      %v1685 = vpop.f32.mrb[0].mxu0
      %v1686 = vpop.f32.mrb[0].mxu0
      %1687 = vdwg.mxu0
      %v1689 = vsel %vm574, %v1357, 0
      %v1692 = vsel %vm638, %v1365, 0
      %1694 = vmatprep.subr.bf16.mxu0 0
      %1695 = vmatpush1.bf16.msra.mxu0 %v1692
      %1696 = vmatprep.subr.bf16.mxu0 0
      %1697 = vmatpush1.bf16.msra.mxu0 0
      %1698 = vmatprep.subr.bf16.mxu0 0
      %1699 = vmatpush1.bf16.msra.mxu0 0
      %1700 = vmatprep.subr.bf16.mxu0 0
      %1701 = vmatpush1.bf16.msra.mxu0 0
      %1702 = vmatprep.subr.bf16.mxu0 0
      %1703 = vmatpush1.bf16.msra.mxu0 0
      %1704 = vmatprep.subr.bf16.mxu0 0
      %1705 = vmatpush1.bf16.msra.mxu0 0
      %1706 = vmatprep.subr.bf16.mxu0 0
      %1707 = vmatpush1.bf16.msra.mxu0 0
      %1708 = vmatprep.subr.bf16.mxu0 0
      %1709 = vmatpush1.bf16.msra.mxu0 0
      %1710 = vmatprep.subr.bf16.mxu0 0
      %1711 = vmatpush1.bf16.msra.mxu0 0
      %1712 = vmatprep.subr.bf16.mxu0 0
      %1713 = vmatpush1.bf16.msra.mxu0 0
      %1714 = vmatprep.subr.bf16.mxu0 0
      %1715 = vmatpush1.bf16.msra.mxu0 0
      %1716 = vmatprep.subr.bf16.mxu0 0
      %1717 = vmatpush1.bf16.msra.mxu0 0
      %1718 = vmatprep.subr.bf16.mxu0 0
      %1719 = vmatpush1.bf16.msra.mxu0 0
      %1720 = vmatprep.subr.bf16.mxu0 0
      %1721 = vmatpush1.bf16.msra.mxu0 0
      %1722 = vmatprep.subr.bf16.mxu0 0
      %1723 = vmatpush1.bf16.msra.mxu0 0
      %1724 = vmatprep.subr.bf16.mxu0 0
      %1725 = vmatpush1.bf16.msra.mxu0 0
      %1726 = vmatprep.mubr.bf16.mxu0 0
      %1727 = vmatmul.mubr.bf16.gmra.mrb[0].mxu0 %v1689
      %v1728 = vpop.f32.mrb[0].mxu0
      %v1729 = vadd.f32 0.0, %v1728
      %v1730 = vpop.f32.mrb[0].mxu0
      %v1731 = vpop.f32.mrb[0].mxu0
      %v1732 = vpop.f32.mrb[0].mxu0
      %1733 = vdwg.mxu0
      %vm1734 = vcmask 125952
      %1735 = vst.msk [vmem:[%s357] sm:$0xf] %vm1734, %v1407
      %1736 = vst.msk [vmem:[%s357 + $0x4] sm:$0xf] %vm1734, %v1453
      %1737 = vst.msk [vmem:[%s357 + $0x8] sm:$0xf] %vm1734, %v1499
      %1738 = vst.msk [vmem:[%s357 + $0xc] sm:$0xf] %vm1734, %v1545
      %1739 = vst.msk [vmem:[%s357 + $0x10] sm:$0xf] %vm1734, %v1591
      %1740 = vst.msk [vmem:[%s357 + $0x14] sm:$0xf] %vm1734, %v1637
      %1741 = vst.msk [vmem:[%s357 + $0x18] sm:$0xf] %vm1734, %v1683
      %1742 = vst.msk [vmem:[%s357 + $0x1c] sm:$0xf] %vm1734, %v1729
      %s1743 = smul.u32 8, %s22
      %p1744 = scmp.lt.s32.totalorder %s21, 1
      %s1745 = scalar_select %p1744, %s21, 1
      %p1746 = scmp.lt.s32.totalorder %s1743, 7
      %s1747 = scalar_select %p1746, %s1743, 7
      %s1748 = smul.addr %s1745, 8
      %s1749 = sadd.s32 %s1747, %s1748
      %s1750 = smul.addr %s1749, 4
      %s1751 = scalar_lea.vmem %s4, %s1750
      %p1752 = scmp.lt.s32.totalorder %s21, 1
      %s1753 = scalar_select %p1752, %s21, 1
      %p1754 = scmp.lt.s32.totalorder %s22, 0
      %s1755 = scalar_select %p1754, %s22, 0
      %s1756 = smul.addr %s1753, 4
      %s1757 = sadd.s32 %s1755, %s1756
      %s1758 = smul.addr %s1757, 8
      %s1759 = scalar_lea.vmem %s5, %s1758
      // Predicated region
      $region37: #{ga_block_forward.2} parent=35 // pred_check
        %p1760 = pneg %p159
      $region38: #{ga_block_forward.2} parent=35 // pred_check_branch
        %1762 = sbr.rel (%p1760) target = $region40
      $region39: #{ga_block_forward.2} parent=35 // pred_region
        %s1763 = smul.u32 8, %s22
      $region40: #{ga_block_forward.2} parent=35 // pred_fallthru
        _
      // Predicated region
      $region41: #{ga_block_forward.2} parent=35 // pred_check
        %p1764 = pneg %p187
      $region42: #{ga_block_forward.2} parent=35 // pred_check_branch
        %1766 = sbr.rel (%p1764) target = $region44
      $region43: #{ga_block_forward.2} parent=35 // pred_region
        _
      $region44: #{ga_block_forward.2} parent=35 // pred_fallthru
        _
    $region36: #{ga_block_forward.2} parent=5 // pred_fallthru
      _
    %p1767 = scmp.le.s32.totalorder 2, %s12
    // Predicated region
    $region45: #{ga_block_forward.2} parent=5 // pred_check
      %p1768 = pneg %p1767
    $region46: #{ga_block_forward.2} parent=5 // pred_check_branch
      %1770 = sbr.rel (%p1768) target = $region48
    $region47: #{ga_block_forward.2} parent=5 // pred_region
      %s1771 = ssub.s32 %s12, 2
      // Predicated region
      $region49: #{ga_block_forward.2} parent=47 // pred_check
        %p1772 = pneg %p165
      $region50: #{ga_block_forward.2} parent=47 // pred_check_branch
        %1774 = sbr.rel (%p1772) target = $region52
      $region51: #{ga_block_forward.2} parent=47 // pred_region
        %s1775 = smul.u32 8, %s24
        %p1776 = scmp.lt.s32.totalorder %s23, 1
        %s1777 = scalar_select %p1776, %s23, 1
        %p1778 = scmp.lt.s32.totalorder %s1775, 7
        %s1779 = scalar_select %p1778, %s1775, 7
        %s1780 = smul.addr %s1777, 8
        %s1781 = sadd.s32 %s1779, %s1780
        %s1782 = smul.addr %s1781, 4
        %s1783 = scalar_lea.vmem %s4, %s1782
      $region52: #{ga_block_forward.2} parent=47 // pred_fallthru
        _
      // Predicated region
      $region53: #{ga_block_forward.2} parent=47 // pred_check
        %p1784 = pneg %p193
      $region54: #{ga_block_forward.2} parent=47 // pred_check_branch
        %1786 = sbr.rel (%p1784) target = $region56
      $region55: #{ga_block_forward.2} parent=47 // pred_region
        %p1787 = scmp.lt.s32.totalorder %s23, 1
        %s1788 = scalar_select %p1787, %s23, 1
        %p1789 = scmp.lt.s32.totalorder %s24, 0
        %s1790 = scalar_select %p1789, %s24, 0
        %s1791 = smul.addr %s1788, 4
        %s1792 = sadd.s32 %s1790, %s1791
        %s1793 = smul.addr %s1792, 8
        %s1794 = scalar_lea.vmem %s5, %s1793
      $region56: #{ga_block_forward.2} parent=47 // pred_fallthru
        _
    $region48: #{ga_block_forward.2} parent=5 // pred_fallthru
      _
  $region6: #{ga_block_forward.2} parent=0 // loop_footer
    %s16 = sadd.s32 1, %s12
  $region7: #{ga_block_forward.2} parent=0 // loop_footer_branch
    %11 = sbr.rel target = $region3
  $region8: #{ga_block_forward.2} parent=0 // loop_exit
    _

// kernel: ga_block_forward.3
$region0: #{ga_block_forward.3}
  #allocation0 [shape = 'u32[]', space=smem, size = 0x4, offset = 0x4, fixed_abs, tag = 'smem constant byte address 0x4 - core index']
  #allocation1 [shape = 'u32[144,128]{1,0:T(1,128)}', space=vmem, size = 0x12000, scoped, tag = 'internal scratch']
  %s0 = inlined_call_operand.vmem [shape: bf16[16,240], index: 0, kind: input, shape index: {}]
  %s1 = inlined_call_operand.vmem [shape: f32[16,32], index: 1, kind: input, shape index: {}]
  %s2 = inlined_call_operand.vmem [shape: f32[16,1], index: 2, kind: input, shape index: {}]
  %s3 = inlined_call_operand.vmem [shape: bf16[240,32], index: 3, kind: input, shape index: {}]
  %s4 = inlined_call_operand.vmem [shape: bf16[3,32,32], index: 4, kind: input, shape index: {}]
  %s5 = inlined_call_operand.vmem [shape: f32[8,32], index: 5, kind: input, shape index: {}]
  %s6 = inlined_call_operand.hbm [shape: f32[16,32], index: 6, kind: output, shape index: {}]
  %s7 = sld [smem:[#allocation0]]
  $region34: #{ga_block_forward.3} parent=0
    _
  %s9 = ssub.s32 1, %s7
  %s10 = scalar_select 0, %s9, %s7
  $region1: #{ga_block_forward.3} parent=0
    #allocation2 [shape = 'u8[8192]{0}', space=vmem, size = 0x2000, scoped, tag = 'output window, operand 0, single buffered']
    #allocation3 [shape = 's32[1]{0}', space=sflag, size = 0x4, scoped, tag = 'scoped memory for ga_block_forward.3']
    %11 = vsyncpa [#allocation3], 0
    // Predicated region
    $region2: #{ga_block_forward.3} parent=1 // pred_check
      _
    $region3: #{ga_block_forward.3} parent=1 // pred_check_branch
      %13 = sbr.rel (0) target = $region5
    $region4: #{ga_block_forward.3} parent=1 // pred_region
      _
    $region5: #{ga_block_forward.3} parent=1 // pred_fallthru
      _
    // Predicated region
    $region6: #{ga_block_forward.3} parent=1 // pred_check
      _
    $region7: #{ga_block_forward.3} parent=1 // pred_check_branch
      %15 = sbr.rel (0) target = $region9
    $region8: #{ga_block_forward.3} parent=1 // pred_region
      _
    $region9: #{ga_block_forward.3} parent=1 // pred_fallthru
      _
    // Predicated region
    $region10: #{ga_block_forward.3} parent=1 // pred_check
      _
    $region11: #{ga_block_forward.3} parent=1 // pred_check_branch
      %17 = sbr.rel (0) target = $region13
    $region12: #{ga_block_forward.3} parent=1 // pred_region
      _
    $region13: #{ga_block_forward.3} parent=1 // pred_fallthru
      _
    // Predicated region
    $region14: #{ga_block_forward.3} parent=1 // pred_check
      _
    $region15: #{ga_block_forward.3} parent=1 // pred_check_branch
      %19 = sbr.rel (0) target = $region17
    $region16: #{ga_block_forward.3} parent=1 // pred_region
      _
    $region17: #{ga_block_forward.3} parent=1 // pred_fallthru
      _
    // Predicated region
    $region18: #{ga_block_forward.3} parent=1 // pred_check
      _
    $region19: #{ga_block_forward.3} parent=1 // pred_check_branch
      %21 = sbr.rel (0) target = $region21
    $region20: #{ga_block_forward.3} parent=1 // pred_region
      _
    $region21: #{ga_block_forward.3} parent=1 // pred_fallthru
      _
    // Predicated region
    $region22: #{ga_block_forward.3} parent=1 // pred_check
      _
    $region23: #{ga_block_forward.3} parent=1 // pred_check_branch
      %23 = sbr.rel (0) target = $region25
    $region24: #{ga_block_forward.3} parent=1 // pred_region
      _
    $region25: #{ga_block_forward.3} parent=1 // pred_fallthru
      _
    %v25 = vld [vmem:[%s0] sm:$0xff]
    %v26 = vld [vmem:[%s0 + $0x8] sm:$0xff]
    %v27 = vld [vmem:[%s3] sm:$0xf]
    %v28 = vld [vmem:[%s3 + $0x4] sm:$0xf]
    %v29 = vld [vmem:[%s3 + $0x8] sm:$0xf]
    %v30 = vld [vmem:[%s3 + $0xc] sm:$0xf]
    %v31 = vld [vmem:[%s3 + $0x10] sm:$0xf]
    %v32 = vld [vmem:[%s3 + $0x14] sm:$0xf]
    %v33 = vld [vmem:[%s3 + $0x18] sm:$0xf]
    %v34 = vld [vmem:[%s3 + $0x1c] sm:$0xf]
    %v35 = vld [vmem:[%s3 + $0x20] sm:$0xf]
    %v36 = vld [vmem:[%s3 + $0x24] sm:$0xf]
    %v37 = vld [vmem:[%s3 + $0x28] sm:$0xf]
    %v38 = vld [vmem:[%s3 + $0x2c] sm:$0xf]
    %v39 = vld [vmem:[%s3 + $0x30] sm:$0xf]
    %v40 = vld [vmem:[%s3 + $0x34] sm:$0xf]
    %v41 = vld [vmem:[%s3 + $0x38] sm:$0xf]
    %v42 = vld [vmem:[%s3 + $0x3c] sm:$0xf]
    %v43 = vld [vmem:[%s3 + $0x40] sm:$0xf]
    %v44 = vld [vmem:[%s3 + $0x44] sm:$0xf]
    %v45 = vld [vmem:[%s3 + $0x48] sm:$0xf]
    %v46 = vld [vmem:[%s3 + $0x4c] sm:$0xf]
    %v47 = vld [vmem:[%s3 + $0x50] sm:$0xf]
    %v48 = vld [vmem:[%s3 + $0x54] sm:$0xf]
    %v49 = vld [vmem:[%s3 + $0x58] sm:$0xf]
    %v50 = vld [vmem:[%s3 + $0x5c] sm:$0xf]
    %v51 = vld [vmem:[%s3 + $0x60] sm:$0xf]
    %v52 = vld [vmem:[%s3 + $0x64] sm:$0xf]
    %v53 = vld [vmem:[%s3 + $0x68] sm:$0xf]
    %v54 = vld [vmem:[%s3 + $0x6c] sm:$0xf]
    %v55 = vld [vmem:[%s3 + $0x70] sm:$0xf]
    %v56 = vld [vmem:[%s3 + $0x74] sm:$0xf]
    %v57 = vld [vmem:[%s5] sm:$0x1]
    %v58 = vlaneseq
    %v59 = vshrl.u32 %v58, 7
    %v60 = vsub.s32 0, %v59
    %v61 = vrot.slane %v57, %v60
    %v64 = vunpack.c.l.b16 %v25
    %v65 = vunpack.c.h.b16 %v25
    %v66 = vunpack.c.l.b16 %v26
    %v67 = vunpack.c.h.b16 %v26
    %v68 = vpack.c.b16 %v66, %v64
    %v69 = vpack.c.b16 %v67, %v65
    %v101 = vunpack.c.l.b16 %v27
    %v102 = vunpack.c.l.b16 %v28
    %v103 = vunpack.c.l.b16 %v29
    %v104 = vunpack.c.l.b16 %v30
    %v105 = vunpack.c.l.b16 %v31
    %v106 = vunpack.c.l.b16 %v32
    %v107 = vunpack.c.l.b16 %v33
    %v108 = vunpack.c.l.b16 %v34
    %v109 = vunpack.c.l.b16 %v35
    %v110 = vunpack.c.l.b16 %v36
    %v111 = vunpack.c.l.b16 %v37
    %v112 = vunpack.c.l.b16 %v38
    %v113 = vunpack.c.l.b16 %v39
    %v114 = vunpack.c.l.b16 %v40
    %v115 = vunpack.c.l.b16 %v41
    %v116 = vunpack.c.l.b16 %v42
    %v117 = vunpack.c.l.b16 %v43
    %v118 = vunpack.c.l.b16 %v44
    %v119 = vunpack.c.l.b16 %v45
    %v120 = vunpack.c.l.b16 %v46
    %v121 = vunpack.c.l.b16 %v47
    %v122 = vunpack.c.l.b16 %v48
    %v123 = vunpack.c.l.b16 %v49
    %v124 = vunpack.c.l.b16 %v50
    %v125 = vunpack.c.l.b16 %v51
    %v126 = vunpack.c.l.b16 %v52
    %v127 = vunpack.c.l.b16 %v53
    %v128 = vunpack.c.l.b16 %v54
    %v129 = vunpack.c.l.b16 %v55
    %v130 = vunpack.c.l.b16 %v56
    %v131 = vpack.c.b16 %v102, %v101
    %v132 = vpack.c.b16 %v104, %v103
    %v133 = vpack.c.b16 %v106, %v105
    %v134 = vpack.c.b16 %v108, %v107
    %v135 = vpack.c.b16 %v110, %v109
    %v136 = vpack.c.b16 %v112, %v111
    %v137 = vpack.c.b16 %v114, %v113
    %v138 = vpack.c.b16 %v116, %v115
    %v139 = vpack.c.b16 %v118, %v117
    %v140 = vpack.c.b16 %v120, %v119
    %v141 = vpack.c.b16 %v122, %v121
    %v142 = vpack.c.b16 %v124, %v123
    %v143 = vpack.c.b16 %v126, %v125
    %v144 = vpack.c.b16 %v128, %v127
    %v145 = vpack.c.b16 %v130, %v129
    %vm161 = vcmask 916480
    %v163 = vsel %vm161, %v69, 0
    %165 = vmatprep.subr.bf16.mxu0 0
    %166 = vmatpush1.bf16.msra.mxu0 %v131
    %167 = vmatprep.subr.bf16.mxu0 0
    %168 = vmatpush1.bf16.msra.mxu0 %v132
    %169 = vmatprep.subr.bf16.mxu0 0
    %170 = vmatpush1.bf16.msra.mxu0 %v133
    %171 = vmatprep.subr.bf16.mxu0 0
    %172 = vmatpush1.bf16.msra.mxu0 %v134
    %173 = vmatprep.subr.bf16.mxu0 0
    %174 = vmatpush1.bf16.msra.mxu0 %v135
    %175 = vmatprep.subr.bf16.mxu0 0
    %176 = vmatpush1.bf16.msra.mxu0 %v136
    %177 = vmatprep.subr.bf16.mxu0 0
    %178 = vmatpush1.bf16.msra.mxu0 %v137
    %179 = vmatprep.subr.bf16.mxu0 0
    %180 = vmatpush1.bf16.msra.mxu0 %v138
    %181 = vmatprep.subr.bf16.mxu0 0
    %182 = vmatpush1.bf16.msra.mxu0 %v139
    %183 = vmatprep.subr.bf16.mxu0 0
    %184 = vmatpush1.bf16.msra.mxu0 %v140
    %185 = vmatprep.subr.bf16.mxu0 0
    %186 = vmatpush1.bf16.msra.mxu0 %v141
    %187 = vmatprep.subr.bf16.mxu0 0
    %188 = vmatpush1.bf16.msra.mxu0 %v142
    %189 = vmatprep.subr.bf16.mxu0 0
    %190 = vmatpush1.bf16.msra.mxu0 %v143
    %191 = vmatprep.subr.bf16.mxu0 0
    %192 = vmatpush1.bf16.msra.mxu0 %v144
    %193 = vmatprep.subr.bf16.mxu0 0
    %194 = vmatpush1.bf16.msra.mxu0 %v145
    %195 = vmatprep.subr.bf16.mxu0 0
    %196 = vmatpush1.bf16.msra.mxu0 0
    %197 = vmatprep.mubr.bf16.mxu0 %v163
    %198 = vmatmul.mubr.bf16.gmra.mrb[0].mxu0 %v68
    %v199 = vpop.f32.mrb[0].mxu0
    %v200 = vadd.f32 %v61, %v199
    %v201 = vpop.f32.mrb[0].mxu0
    %v202 = vpop.f32.mrb[0].mxu0
    %v203 = vadd.f32 %v61, %v202
    %v204 = vpop.f32.mrb[0].mxu0
    %205 = vdwg.mxu0
    %v206 = vld [vmem:[%s2] sm:$0xff]
    %v207 = vld [vmem:[%s2 + $0x8] sm:$0xff]
    %209 = vset.pattern.permute.xlu0 0
    %210 = vperm.xlu0 %209, %v206
    %v211 = vpop.permute.xlu0 %210
    %214 = vset.pattern.permute.xlu0 0
    %215 = vperm.xlu0 %214, %v207
    %v216 = vpop.permute.xlu0 %215
    %v218 = vmul.f32 %v200, %v211
    %v219 = vmul.f32 %v203, %v216
    %v220 = vld [vmem:[%s1] sm:$0xff]
    %v221 = vld [vmem:[%s1 + $0x8] sm:$0xff]
    %v222 = vadd.f32 %v220, %v218
    %v223 = vadd.f32 %v221, %v219
    %vm224 = vcmask 261120
    %v225 = vsel %vm224, %v222, 0.0
    %226 = vadd.xlane.f32.xlu0 %v225
    %v227 = vpop.xlane.xlu0 %226
    %v228 = vsel %vm224, %v223, 0.0
    %229 = vadd.xlane.f32.xlu0 %v228
    %v230 = vpop.xlane.xlu0 %229
    %v231 = vrcp.pop 32.0
    %v232 = vmul.f32 %v227, %v231
    %v233 = vmul.f32 %v230, %v231
    %v234 = vsub.f32 %v222, %v232
    %v235 = vsub.f32 %v223, %v233
    %v236 = vmul.f32 %v234, %v234
    %v237 = vmul.f32 %v235, %v235
    %v238 = vsel %vm224, %v236, 0.0
    %239 = vadd.xlane.f32.xlu0 %v238
    %v240 = vpop.xlane.xlu0 %239
    %v241 = vsel %vm224, %v237, 0.0
    %242 = vadd.xlane.f32.xlu0 %v241
    %v243 = vpop.xlane.xlu0 %242
    %v244 = vmul.f32 %v240, %v231
    %v245 = vmul.f32 %v243, %v231
    %v246 = vadd.f32 %v244, 1e-05
    %v247 = vadd.f32 %v245, 1e-05
    %v248 = vrsqrt.pop %v246
    %v249 = vrsqrt.pop %v247
    %v250 = vmul.f32 %v234, %v248
    %v251 = vmul.f32 %v235, %v249
    %v252 = vld [vmem:[%s5 + $0x1] sm:$0x1]
    %v253 = vlaneseq
    %v254 = vshrl.u32 %v253, 7
    %v255 = vsub.s32 0, %v254
    %v256 = vrot.slane %v252, %v255
    %v257 = vmul.f32 %v250, %v256
    %v258 = vmul.f32 %v251, %v256
    %v259 = vld [vmem:[%s5 + $0x2] sm:$0x1]
    %v260 = vlaneseq
    %v261 = vshrl.u32 %v260, 7
    %v262 = vsub.s32 0, %v261
    %v263 = vrot.slane %v259, %v262
    %v264 = vadd.f32 %v257, %v263
    %v265 = vadd.f32 %v258, %v263
    %v266 = vpack.c.bf16 %v265, %v264
    %v267 = vld [vmem:[%s4] sm:$0xf]
    %v268 = vld [vmem:[%s4 + $0x4] sm:$0xf]
    %v269 = vld [vmem:[%s4 + $0x8] sm:$0xf]
    %v270 = vld [vmem:[%s4 + $0xc] sm:$0xf]
    %v271 = vld [vmem:[%s5 + $0x3] sm:$0x1]
    %v272 = vlaneseq
    %v273 = vshrl.u32 %v272, 7
    %v274 = vsub.s32 0, %v273
    %v275 = vrot.slane %v271, %v274
    %v280 = vunpack.c.l.b16 %v267
    %v281 = vunpack.c.l.b16 %v268
    %v282 = vunpack.c.l.b16 %v269
    %v283 = vunpack.c.l.b16 %v270
    %v284 = vpack.c.b16 %v281, %v280
    %v285 = vpack.c.b16 %v283, %v282
    %v289 = vsel %vm224, %v266, 0
    %291 = vmatprep.subr.bf16.mxu0 0
    %292 = vmatpush1.bf16.msra.mxu0 %v284
    %293 = vmatprep.subr.bf16.mxu0 0
    %294 = vmatpush1.bf16.msra.mxu0 %v285
    %295 = vmatprep.subr.bf16.mxu0 0
    %296 = vmatpush1.bf16.msra.mxu0 0
    %297 = vmatprep.subr.bf16.mxu0 0
    %298 = vmatpush1.bf16.msra.mxu0 0
    %299 = vmatprep.subr.bf16.mxu0 0
    %300 = vmatpush1.bf16.msra.mxu0 0
    %301 = vmatprep.subr.bf16.mxu0 0
    %302 = vmatpush1.bf16.msra.mxu0 0
    %303 = vmatprep.subr.bf16.mxu0 0
    %304 = vmatpush1.bf16.msra.mxu0 0
    %305 = vmatprep.subr.bf16.mxu0 0
    %306 = vmatpush1.bf16.msra.mxu0 0
    %307 = vmatprep.subr.bf16.mxu0 0
    %308 = vmatpush1.bf16.msra.mxu0 0
    %309 = vmatprep.subr.bf16.mxu0 0
    %310 = vmatpush1.bf16.msra.mxu0 0
    %311 = vmatprep.subr.bf16.mxu0 0
    %312 = vmatpush1.bf16.msra.mxu0 0
    %313 = vmatprep.subr.bf16.mxu0 0
    %314 = vmatpush1.bf16.msra.mxu0 0
    %315 = vmatprep.subr.bf16.mxu0 0
    %316 = vmatpush1.bf16.msra.mxu0 0
    %317 = vmatprep.subr.bf16.mxu0 0
    %318 = vmatpush1.bf16.msra.mxu0 0
    %319 = vmatprep.subr.bf16.mxu0 0
    %320 = vmatpush1.bf16.msra.mxu0 0
    %321 = vmatprep.subr.bf16.mxu0 0
    %322 = vmatpush1.bf16.msra.mxu0 0
    %323 = vmatprep.mubr.bf16.mxu0 0
    %324 = vmatmul.mubr.bf16.gmra.mrb[0].mxu0 %v289
    %v325 = vpop.f32.mrb[0].mxu0
    %v326 = vadd.f32 %v275, %v325
    %v327 = vpop.f32.mrb[0].mxu0
    %v328 = vpop.f32.mrb[0].mxu0
    %v329 = vadd.f32 %v275, %v328
    %v330 = vpop.f32.mrb[0].mxu0
    %331 = vdwg.mxu0
    %v332 = vmax.f32 %v326, 0.0
    %v333 = vmax.f32 %v329, 0.0
    %v334 = vpack.c.bf16 %v333, %v332
    %s335 = scalar_lea.vmem %s4, 16
    %v336 = vld [vmem:[%s335] sm:$0xf]
    %v337 = vld [vmem:[%s335 + $0x4] sm:$0xf]
    %v338 = vld [vmem:[%s335 + $0x8] sm:$0xf]
    %v339 = vld [vmem:[%s335 + $0xc] sm:$0xf]
    %v340 = vld [vmem:[%s5 + $0x4] sm:$0x1]
    %v341 = vlaneseq
    %v342 = vshrl.u32 %v341, 7
    %v343 = vsub.s32 0, %v342
    %v344 = vrot.slane %v340, %v343
    %v349 = vunpack.c.l.b16 %v336
    %v350 = vunpack.c.l.b16 %v337
    %v351 = vunpack.c.l.b16 %v338
    %v352 = vunpack.c.l.b16 %v339
    %v353 = vpack.c.b16 %v350, %v349
    %v354 = vpack.c.b16 %v352, %v351
    %v358 = vsel %vm224, %v334, 0
    %360 = vmatprep.subr.bf16.mxu0 0
    %361 = vmatpush1.bf16.msra.mxu0 %v353
    %362 = vmatprep.subr.bf16.mxu0 0
    %363 = vmatpush1.bf16.msra.mxu0 %v354
    %364 = vmatprep.subr.bf16.mxu0 0
    %365 = vmatpush1.bf16.msra.mxu0 0
    %366 = vmatprep.subr.bf16.mxu0 0
    %367 = vmatpush1.bf16.msra.mxu0 0
    %368 = vmatprep.subr.bf16.mxu0 0
    %369 = vmatpush1.bf16.msra.mxu0 0
    %370 = vmatprep.subr.bf16.mxu0 0
    %371 = vmatpush1.bf16.msra.mxu0 0
    %372 = vmatprep.subr.bf16.mxu0 0
    %373 = vmatpush1.bf16.msra.mxu0 0
    %374 = vmatprep.subr.bf16.mxu0 0
    %375 = vmatpush1.bf16.msra.mxu0 0
    %376 = vmatprep.subr.bf16.mxu0 0
    %377 = vmatpush1.bf16.msra.mxu0 0
    %378 = vmatprep.subr.bf16.mxu0 0
    %379 = vmatpush1.bf16.msra.mxu0 0
    %380 = vmatprep.subr.bf16.mxu0 0
    %381 = vmatpush1.bf16.msra.mxu0 0
    %382 = vmatprep.subr.bf16.mxu0 0
    %383 = vmatpush1.bf16.msra.mxu0 0
    %384 = vmatprep.subr.bf16.mxu0 0
    %385 = vmatpush1.bf16.msra.mxu0 0
    %386 = vmatprep.subr.bf16.mxu0 0
    %387 = vmatpush1.bf16.msra.mxu0 0
    %388 = vmatprep.subr.bf16.mxu0 0
    %389 = vmatpush1.bf16.msra.mxu0 0
    %390 = vmatprep.subr.bf16.mxu0 0
    %391 = vmatpush1.bf16.msra.mxu0 0
    %392 = vmatprep.mubr.bf16.mxu0 0
    %393 = vmatmul.mubr.bf16.gmra.mrb[0].mxu0 %v358
    %v394 = vpop.f32.mrb[0].mxu0
    %v395 = vadd.f32 %v344, %v394
    %v396 = vpop.f32.mrb[0].mxu0
    %v397 = vpop.f32.mrb[0].mxu0
    %v398 = vadd.f32 %v344, %v397
    %v399 = vpop.f32.mrb[0].mxu0
    %400 = vdwg.mxu0
    %v401 = vmax.f32 %v395, 0.0
    %v402 = vmax.f32 %v398, 0.0
    %v403 = vpack.c.bf16 %v402, %v401
    %s404 = scalar_lea.vmem %s4, 32
    %v405 = vld [vmem:[%s404] sm:$0xf]
    %v406 = vld [vmem:[%s404 + $0x4] sm:$0xf]
    %v407 = vld [vmem:[%s404 + $0x8] sm:$0xf]
    %v408 = vld [vmem:[%s404 + $0xc] sm:$0xf]
    %v409 = vld [vmem:[%s5 + $0x5] sm:$0x1]
    %v410 = vlaneseq
    %v411 = vshrl.u32 %v410, 7
    %v412 = vsub.s32 0, %v411
    %v413 = vrot.slane %v409, %v412
    %v418 = vunpack.c.l.b16 %v405
    %v419 = vunpack.c.l.b16 %v406
    %v420 = vunpack.c.l.b16 %v407
    %v421 = vunpack.c.l.b16 %v408
    %v422 = vpack.c.b16 %v419, %v418
    %v423 = vpack.c.b16 %v421, %v420
    %v427 = vsel %vm224, %v403, 0
    %429 = vmatprep.subr.bf16.mxu0 0
    %430 = vmatpush1.bf16.msra.mxu0 %v422
    %431 = vmatprep.subr.bf16.mxu0 0
    %432 = vmatpush1.bf16.msra.mxu0 %v423
    %433 = vmatprep.subr.bf16.mxu0 0
    %434 = vmatpush1.bf16.msra.mxu0 0
    %435 = vmatprep.subr.bf16.mxu0 0
    %436 = vmatpush1.bf16.msra.mxu0 0
    %437 = vmatprep.subr.bf16.mxu0 0
    %438 = vmatpush1.bf16.msra.mxu0 0
    %439 = vmatprep.subr.bf16.mxu0 0
    %440 = vmatpush1.bf16.msra.mxu0 0
    %441 = vmatprep.subr.bf16.mxu0 0
    %442 = vmatpush1.bf16.msra.mxu0 0
    %443 = vmatprep.subr.bf16.mxu0 0
    %444 = vmatpush1.bf16.msra.mxu0 0
    %445 = vmatprep.subr.bf16.mxu0 0
    %446 = vmatpush1.bf16.msra.mxu0 0
    %447 = vmatprep.subr.bf16.mxu0 0
    %448 = vmatpush1.bf16.msra.mxu0 0
    %449 = vmatprep.subr.bf16.mxu0 0
    %450 = vmatpush1.bf16.msra.mxu0 0
    %451 = vmatprep.subr.bf16.mxu0 0
    %452 = vmatpush1.bf16.msra.mxu0 0
    %453 = vmatprep.subr.bf16.mxu0 0
    %454 = vmatpush1.bf16.msra.mxu0 0
    %455 = vmatprep.subr.bf16.mxu0 0
    %456 = vmatpush1.bf16.msra.mxu0 0
    %457 = vmatprep.subr.bf16.mxu0 0
    %458 = vmatpush1.bf16.msra.mxu0 0
    %459 = vmatprep.subr.bf16.mxu0 0
    %460 = vmatpush1.bf16.msra.mxu0 0
    %461 = vmatprep.mubr.bf16.mxu0 0
    %462 = vmatmul.mubr.bf16.gmra.mrb[0].mxu0 %v427
    %v463 = vpop.f32.mrb[0].mxu0
    %v464 = vadd.f32 %v413, %v463
    %v465 = vpop.f32.mrb[0].mxu0
    %v466 = vpop.f32.mrb[0].mxu0
    %v467 = vadd.f32 %v413, %v466
    %v468 = vpop.f32.mrb[0].mxu0
    %469 = vdwg.mxu0
    %v470 = vadd.f32 %v264, %v464
    %v471 = vadd.f32 %v265, %v467
    %v472 = vsel %vm224, %v470, 0.0
    %473 = vadd.xlane.f32.xlu0 %v472
    %v474 = vpop.xlane.xlu0 %473
    %v475 = vsel %vm224, %v471, 0.0
    %476 = vadd.xlane.f32.xlu0 %v475
    %v477 = vpop.xlane.xlu0 %476
    %v478 = vmul.f32 %v474, %v231
    %v479 = vmul.f32 %v477, %v231
    %v480 = vsub.f32 %v470, %v478
    %v481 = vsub.f32 %v471, %v479
    %v482 = vmul.f32 %v480, %v480
    %v483 = vmul.f32 %v481, %v481
    %v484 = vsel %vm224, %v482, 0.0
    %485 = vadd.xlane.f32.xlu0 %v484
    %v486 = vpop.xlane.xlu0 %485
    %v487 = vsel %vm224, %v483, 0.0
    %488 = vadd.xlane.f32.xlu0 %v487
    %v489 = vpop.xlane.xlu0 %488
    %v490 = vmul.f32 %v486, %v231
    %v491 = vmul.f32 %v489, %v231
    %v492 = vadd.f32 %v490, 1e-05
    %v493 = vadd.f32 %v491, 1e-05
    %v494 = vrsqrt.pop %v492
    %v495 = vrsqrt.pop %v493
    %v496 = vmul.f32 %v480, %v494
    %v497 = vmul.f32 %v481, %v495
    %v498 = vld [vmem:[%s5 + $0x6] sm:$0x1]
    %v499 = vlaneseq
    %v500 = vshrl.u32 %v499, 7
    %v501 = vsub.s32 0, %v500
    %v502 = vrot.slane %v498, %v501
    %v503 = vmul.f32 %v496, %v502
    %v504 = vmul.f32 %v497, %v502
    %v505 = vld [vmem:[%s5 + $0x7] sm:$0x1]
    %v506 = vlaneseq
    %v507 = vshrl.u32 %v506, 7
    %v508 = vsub.s32 0, %v507
    %v509 = vrot.slane %v505, %v508
    %v510 = vadd.f32 %v503, %v509
    %v511 = vadd.f32 %v504, %v509
    %512 = vst.msk [vmem:[#allocation2] sm:$0xff] %vm224, %v510
    %513 = vst.msk [vmem:[#allocation2 + $0x8] sm:$0xff] %vm224, %v511
    // Predicated region
    $region26: #{ga_block_forward.3} parent=1 // pred_check
      _
    $region27: #{ga_block_forward.3} parent=1 // pred_check_branch
      %515 = sbr.rel (0) target = $region29
    $region28: #{ga_block_forward.3} parent=1 // pred_region
      %s517 = ssub.s32 256, 256
      %518 = vsyncadd [#allocation3], %s517
      %s519 = sshll.u32 [#allocation2], 4
      %s520 = int_to_ptr.vmem [resolvable:$true] %s519
      %525 = dma.vmem_to_hbm [thread:$0]  %s520, 256, %s6, [#allocation3], 128, 128, 8
    $region29: #{ga_block_forward.3} parent=1 // pred_fallthru
      _
    // Predicated region
    $region30: #{ga_block_forward.3} parent=1 // pred_check
      _
    $region31: #{ga_block_forward.3} parent=1 // pred_check_branch
      %527 = sbr.rel (0) target = $region33
    $region32: #{ga_block_forward.3} parent=1 // pred_region
      %528 = dma.done [#allocation3], 256
    $region33: #{ga_block_forward.3} parent=1 // pred_fallthru
      _
    %529 = vsyncpa [#allocation3], 1

</llo_original>
